<compile_context>
chip_gen: v6e
topology: v6e:2x2x1
jax: 0.10.0
libtpu: 0.0.40
codegen_flags: <defaults>
</compile_context>

<pallas_src>
import jax
import jax.numpy as jnp
from jax.experimental import pallas as pl
from jax.experimental.pallas import tpu as pltpu

# --- module hyper-parameters (small, deterministic) -------------------------
VOCAB = 32        # voca_size
EMBED = 32        # embed_size
OUT = 32          # output_size
HEADS = 4         # n_head
HISTORY = 2       # history_size
CONTEXT = HISTORY + 1
EPS = 1e-5        # layer_norm_epsilon
_PREC = jax.lax.Precision.HIGHEST


def predictor_kernel(tok_ref, tab_ref, shift_ref, ffn_w_ref, pb_ref, o_ref):
    """Single invocation for the whole (flattened) batch.

    tok_ref  : [BT, 1]                 int32 token ids
    tab_ref  : [VOCAB, EMBED+CONTEXT]  [embedding | embedding @ pos_sum*scale]
    shift_ref: [CONTEXT-1, BT, BT]     banded 0/1 lag-shift (+causal mask) mats
    ffn_w_ref: [EMBED, OUT]            ffn weight (already transposed)
    pb_ref   : [3, OUT]                packed (ffn_bias, ln_gamma, ln_beta)
    o_ref    : [BT, OUT]
    """
    BT = tok_ref.shape[0]

    # --- fused gather: ONE MXU push gives embeddings AND position coefs ------
    ids = tok_ref[...]                                            # [BT, 1]
    iota_v = jax.lax.broadcasted_iota(jnp.int32, (BT, VOCAB), 1)
    onehot = (iota_v == ids).astype(jnp.float32)                  # [BT, VOCAB]
    aug = jnp.dot(onehot, tab_ref[...],
                  preferred_element_type=jnp.float32,
                  precision=_PREC)                                # [BT, E+C]
    emb = aug[:, :EMBED]                                          # [BT, E]
    # embed_dropout: identity in eval mode

    # --- window pooling ------------------------------------------------------
    # out[r] = sum_d coef[r-d, C-1-d] * emb[r-d] * [t(r) >= d]
    # d = 0: current token, no shift, never masked.
    acc = aug[:, EMBED + CONTEXT - 1:EMBED + CONTEXT] * emb       # [BT, E]
    for d in range(1, CONTEXT):                                   # CONTEXT-1 = 2 iters
        # per-lag product (VPU broadcast-MAC, fully aligned)
        prod = aug[:, EMBED + CONTEXT - 1 - d:EMBED + CONTEXT - d] * emb
        # lag shift + per-batch causal mask via a tiny banded 0/1 matmul (MXU)
        acc = acc + jnp.dot(shift_ref[d - 1], prod,
                            preferred_element_type=jnp.float32,
                            precision=_PREC)
    # (1/(HEADS*CONTEXT) scale already folded into the coef table.)

    # --- ffn: Linear(EMBED, OUT) ----------------------------------------------
    y = jnp.dot(acc, ffn_w_ref[...],
                preferred_element_type=jnp.float32,
                precision=_PREC) + pb_ref[0:1, :]                 # [BT, OUT]

    # --- LayerNorm over last dim ----------------------------------------------
    mean = jnp.mean(y, axis=-1, keepdims=True)
    var = jnp.mean(jnp.square(y - mean), axis=-1, keepdims=True)
    y = (y - mean) * jax.lax.rsqrt(var + EPS)
    y = y * pb_ref[1:2, :] + pb_ref[2:3, :]

    # --- swish activation, single contiguous store -----------------------------
    y = y * (1.0 / (1.0 + jnp.exp(-y)))
    o_ref[...] = y.astype(o_ref.dtype)


def _shift_matrices(B, T):
    """S_d[r, r'] = 1 iff r' == r-d and (r mod T) >= d  (lag shift + causal mask)."""
    BT = B * T
    r = jnp.arange(BT, dtype=jnp.int32)
    rows, cols = r[:, None], r[None, :]
    mats = []
    for d in range(1, CONTEXT):
        sel = (cols == rows - d) & ((rows % T) >= d)
        mats.append(sel.astype(jnp.float32))
    return jnp.stack(mats, axis=0)                     # [CONTEXT-1, BT, BT]


def embedding_predictor_forward(tokens, params):
    """tokens: int32 [B, T].  Returns float32 [B, T, OUT]."""
    B, T = tokens.shape
    BT = B * T

    # One-time, parameter-sized re-layouts in the wrapper:
    # pos_embed.weight [H, E*C] -> [H, E, C]; sum heads; fold 1/(H*C) scale.
    scale = 1.0 / (HEADS * CONTEXT)
    pos_sum = params["pos_w"].reshape(HEADS, EMBED, CONTEXT).sum(axis=0) * scale
    tab_coef = jnp.dot(params["embed"], pos_sum, precision=_PREC)     # [V, C]
    tab_aug = jnp.concatenate([params["embed"], tab_coef], axis=1)    # [V, E+C]
    ffn_w = params["ffn_w"].T                                         # [E, OUT]
    packed = jnp.stack([params["ffn_b"], params["gamma"], params["beta"]],
                       axis=0)                                        # [3, OUT]
    shift = _shift_matrices(B, T)                                     # [C-1, BT, BT]
    tok = tokens.reshape(BT, 1).astype(jnp.int32)

    vmem = pl.BlockSpec(memory_space=pltpu.MemorySpace.VMEM)
    out = pl.pallas_call(
        predictor_kernel,
        out_shape=jax.ShapeDtypeStruct((BT, OUT), jnp.float32),
        in_specs=[vmem, vmem, vmem, vmem, vmem],
        out_specs=vmem,
    )(tok, tab_aug, shift, ffn_w, packed)
    return out.reshape(B, T, OUT)


def reference_forward(tokens, params):
    """Pure-JAX replica of the PyTorch forward (for correctness check)."""
    emb = jnp.take(params["embed"], tokens, axis=0)
    B, T, E = emb.shape
    x = jnp.concatenate([jnp.zeros((B, CONTEXT - 1, E), emb.dtype), emb], axis=1)
    win = jnp.stack([x[:, c:c + T, :] for c in range(CONTEXT)], axis=2)  # [B,T,C,E]
    pos = params["pos_w"].reshape(HEADS, EMBED, CONTEXT).transpose(0, 2, 1)  # [H,C,E]
    w = jnp.einsum("btce,hce->bthc", win, pos, precision=_PREC)
    out = jnp.einsum("bthc,btce->bte", w, win, precision=_PREC) / (HEADS * CONTEXT)
    out = jnp.dot(out, params["ffn_w"].T, precision=_PREC) + params["ffn_b"]
    mean = out.mean(-1, keepdims=True)
    var = ((out - mean) ** 2).mean(-1, keepdims=True)
    out = (out - mean) / jnp.sqrt(var + EPS) * params["gamma"] + params["beta"]
    return out * jax.nn.sigmoid(out)


def make_params(key):
    k = jax.random.split(key, 4)
    return {
        "embed": jax.random.normal(k[0], (VOCAB, EMBED), jnp.float32) * 0.1,
        "pos_w": jax.random.normal(k[1], (HEADS, EMBED * CONTEXT), jnp.float32) * 0.1,
        "ffn_w": jax.random.normal(k[2], (OUT, EMBED), jnp.float32) * 0.1,
        "ffn_b": jnp.zeros((OUT,), jnp.float32),
        "gamma": jnp.ones((OUT,), jnp.float32),
        "beta": jnp.zeros((OUT,), jnp.float32),
    }


if __name__ == "__main__":
    key = jax.random.PRNGKey(0)
    kp, kt = jax.random.split(key)
    params = make_params(kp)

    B, T = 2, 8
    tokens = jax.random.randint(kt, (B, T), 0, VOCAB, dtype=jnp.int32)

    out = embedding_predictor_forward(tokens, params)
    out = jax.block_until_ready(out)

    ref = reference_forward(tokens, params)
    assert out.shape == (B, T, OUT)
    assert jnp.allclose(out, ref, atol=1e-4, rtol=1e-4), "mismatch vs reference"
    print("KERNEL_OK")
</pallas_src>

<mosaic_0001>
module attributes {stable_mosaic.version = 11 : i64} {
  func.func @predictor_kernel(%arg0: memref<16x1xi32, #tpu.memory_space<vmem>>, %arg1: memref<32x35xf32, #tpu.memory_space<vmem>>, %arg2: memref<2x16x16xf32, #tpu.memory_space<vmem>>, %arg3: memref<32x32xf32, #tpu.memory_space<vmem>>, %arg4: memref<3x32xf32, #tpu.memory_space<vmem>>, %arg5: memref<16x32xf32, #tpu.memory_space<vmem>>) attributes {dimension_semantics = [], scalar_prefetch = 0 : i64, scratch_operands = 0 : i64, tpu.core_type = #tpu.core_type<tc>} {
    %c0 = arith.constant 0 : index
    %c0_0 = arith.constant 0 : index
    %0 = vector.load %arg0[%c0, %c0_0] : memref<16x1xi32, #tpu.memory_space<vmem>>, vector<16x1xi32>
    %1 = tpu.iota {dimensions = array<i32: 1>} : vector<16x32xi32>
    %2 = vector.broadcast %0 : vector<16x1xi32> to vector<16x32xi32>
    %3 = arith.cmpi eq, %1, %2 : vector<16x32xi32>
    %4 = arith.extui %3 : vector<16x32xi1> to vector<16x32xi32>
    %5 = arith.sitofp %4 : vector<16x32xi32> to vector<16x32xf32>
    %c0_1 = arith.constant 0 : index
    %c0_2 = arith.constant 0 : index
    %6 = vector.load %arg1[%c0_1, %c0_2] : memref<32x35xf32, #tpu.memory_space<vmem>>, vector<32x35xf32>
    %cst = arith.constant dense<0.000000e+00> : vector<16x35xf32>
    %7 = tpu.matmul %5, %6, %cst {dimension_numbers = #tpu.dot_dimension_numbers<[1], [0], [0], [1], [0, 0, 1, 1], [], []>, precision = #tpu.contract_precision<fp32>} : vector<16x32xf32>, vector<32x35xf32>, vector<16x35xf32> -> vector<16x35xf32>
    %8 = vector.extract_strided_slice %7 {offsets = [0, 0], sizes = [16, 32], strides = [1, 1]} : vector<16x35xf32> to vector<16x32xf32>
    %9 = vector.extract_strided_slice %7 {offsets = [0, 34], sizes = [16, 1], strides = [1, 1]} : vector<16x35xf32> to vector<16x1xf32>
    %10 = vector.broadcast %9 : vector<16x1xf32> to vector<16x32xf32>
    %11 = arith.mulf %10, %8 : vector<16x32xf32>
    %12 = vector.extract_strided_slice %7 {offsets = [0, 33], sizes = [16, 1], strides = [1, 1]} : vector<16x35xf32> to vector<16x1xf32>
    %13 = vector.broadcast %12 : vector<16x1xf32> to vector<16x32xf32>
    %14 = arith.mulf %13, %8 : vector<16x32xf32>
    %c0_3 = arith.constant 0 : index
    %c0_4 = arith.constant 0 : index
    %c0_5 = arith.constant 0 : index
    %15 = vector.load %arg2[%c0_3, %c0_4, %c0_5] : memref<2x16x16xf32, #tpu.memory_space<vmem>>, vector<1x16x16xf32>
    %16 = vector.shape_cast %15 : vector<1x16x16xf32> to vector<16x16xf32>
    %cst_6 = arith.constant dense<0.000000e+00> : vector<16x32xf32>
    %17 = tpu.matmul %16, %14, %cst_6 {dimension_numbers = #tpu.dot_dimension_numbers<[1], [0], [0], [1], [0, 0, 1, 1], [], []>, precision = #tpu.contract_precision<fp32>} : vector<16x16xf32>, vector<16x32xf32>, vector<16x32xf32> -> vector<16x32xf32>
    %18 = arith.addf %11, %17 : vector<16x32xf32>
    %19 = vector.extract_strided_slice %7 {offsets = [0, 32], sizes = [16, 1], strides = [1, 1]} : vector<16x35xf32> to vector<16x1xf32>
    %20 = vector.broadcast %19 : vector<16x1xf32> to vector<16x32xf32>
    %21 = arith.mulf %20, %8 : vector<16x32xf32>
    %c1 = arith.constant 1 : index
    %c0_7 = arith.constant 0 : index
    %c0_8 = arith.constant 0 : index
    %22 = vector.load %arg2[%c1, %c0_7, %c0_8] : memref<2x16x16xf32, #tpu.memory_space<vmem>>, vector<1x16x16xf32>
    %23 = vector.shape_cast %22 : vector<1x16x16xf32> to vector<16x16xf32>
    %cst_9 = arith.constant dense<0.000000e+00> : vector<16x32xf32>
    %24 = tpu.matmul %23, %21, %cst_9 {dimension_numbers = #tpu.dot_dimension_numbers<[1], [0], [0], [1], [0, 0, 1, 1], [], []>, precision = #tpu.contract_precision<fp32>} : vector<16x16xf32>, vector<16x32xf32>, vector<16x32xf32> -> vector<16x32xf32>
    %25 = arith.addf %18, %24 : vector<16x32xf32>
    %c0_10 = arith.constant 0 : index
    %c0_11 = arith.constant 0 : index
    %26 = vector.load %arg3[%c0_10, %c0_11] : memref<32x32xf32, #tpu.memory_space<vmem>>, vector<32x32xf32>
    %cst_12 = arith.constant dense<0.000000e+00> : vector<16x32xf32>
    %27 = tpu.matmul %25, %26, %cst_12 {dimension_numbers = #tpu.dot_dimension_numbers<[1], [0], [0], [1], [0, 0, 1, 1], [], []>, precision = #tpu.contract_precision<fp32>} : vector<16x32xf32>, vector<32x32xf32>, vector<16x32xf32> -> vector<16x32xf32>
    %c0_13 = arith.constant 0 : index
    %c0_14 = arith.constant 0 : index
    %28 = vector.load %arg4[%c0_13, %c0_14] : memref<3x32xf32, #tpu.memory_space<vmem>>, vector<1x32xf32>
    %29 = vector.broadcast %28 : vector<1x32xf32> to vector<16x32xf32>
    %30 = arith.addf %27, %29 : vector<16x32xf32>
    %cst_15 = arith.constant dense<0.000000e+00> : vector<16xf32>
    %31 = vector.multi_reduction <add>, %30, %cst_15 [1] : vector<16x32xf32> to vector<16xf32>
    %32 = vector.shape_cast %31 : vector<16xf32> to vector<16x1xf32>
    %cst_16 = arith.constant 3.200000e+01 : f32
    %33 = vector.broadcast %cst_16 : f32 to vector<16x1xf32>
    %34 = arith.divf %32, %33 : vector<16x1xf32>
    %35 = vector.broadcast %34 : vector<16x1xf32> to vector<16x32xf32>
    %36 = arith.subf %30, %35 : vector<16x32xf32>
    %37 = arith.mulf %36, %36 : vector<16x32xf32>
    %cst_17 = arith.constant dense<0.000000e+00> : vector<16xf32>
    %38 = vector.multi_reduction <add>, %37, %cst_17 [1] : vector<16x32xf32> to vector<16xf32>
    %39 = vector.shape_cast %38 : vector<16xf32> to vector<16x1xf32>
    %cst_18 = arith.constant 3.200000e+01 : f32
    %40 = vector.broadcast %cst_18 : f32 to vector<16x1xf32>
    %41 = arith.divf %39, %40 : vector<16x1xf32>
    %42 = vector.broadcast %34 : vector<16x1xf32> to vector<16x32xf32>
    %43 = arith.subf %30, %42 : vector<16x32xf32>
    %cst_19 = arith.constant 9.99999974E-6 : f32
    %44 = vector.broadcast %cst_19 : f32 to vector<16x1xf32>
    %45 = arith.addf %41, %44 : vector<16x1xf32>
    %46 = math.rsqrt %45 : vector<16x1xf32>
    %47 = vector.broadcast %46 : vector<16x1xf32> to vector<16x32xf32>
    %48 = arith.mulf %43, %47 : vector<16x32xf32>
    %c1_20 = arith.constant 1 : index
    %c0_21 = arith.constant 0 : index
    %49 = vector.load %arg4[%c1_20, %c0_21] : memref<3x32xf32, #tpu.memory_space<vmem>>, vector<1x32xf32>
    %50 = vector.broadcast %49 : vector<1x32xf32> to vector<16x32xf32>
    %51 = arith.mulf %48, %50 : vector<16x32xf32>
    %c2 = arith.constant 2 : index
    %c0_22 = arith.constant 0 : index
    %52 = vector.load %arg4[%c2, %c0_22] : memref<3x32xf32, #tpu.memory_space<vmem>>, vector<1x32xf32>
    %53 = vector.broadcast %52 : vector<1x32xf32> to vector<16x32xf32>
    %54 = arith.addf %51, %53 : vector<16x32xf32>
    %cst_23 = arith.constant 0.000000e+00 : f32
    %55 = vector.broadcast %cst_23 : f32 to vector<16x32xf32>
    %56 = arith.subf %55, %54 : vector<16x32xf32>
    %57 = math.exp %56 : vector<16x32xf32>
    %cst_24 = arith.constant 1.000000e+00 : f32
    %58 = vector.broadcast %cst_24 : f32 to vector<16x32xf32>
    %59 = arith.addf %58, %57 : vector<16x32xf32>
    %cst_25 = arith.constant 1.000000e+00 : f32
    %60 = vector.broadcast %cst_25 : f32 to vector<16x32xf32>
    %61 = arith.divf %60, %59 : vector<16x32xf32>
    %62 = arith.mulf %54, %61 : vector<16x32xf32>
    %c0_26 = arith.constant 0 : index
    %c0_27 = arith.constant 0 : index
    %63 = vector.load %arg5[%c0_26, %c0_27] : memref<16x32xf32, #tpu.memory_space<vmem>>, vector<16x32xf32>
    tpu.vector_store %arg5[%c0_26, %c0_27], %62 {strides = array<i32>} : memref<16x32xf32, #tpu.memory_space<vmem>>, vector<16x32xf32>,
    return
  }
}

</mosaic_0001>

<llo_original>
// kernel: tpu_custom_call.1
$region0: #{tpu_custom_call.1}
  #allocation0 [shape = 'u32[]', space=smem, size = 0x4, offset = 0x4, fixed_abs, tag = 'smem constant byte address 0x4 - core index']
  #allocation1 [shape = 'u32[144,128]{1,0:T(1,128)}', space=vmem, size = 0x12000, scoped, tag = 'internal scratch']
  %s0 = inlined_call_operand.vmem [shape: s32[16,1], index: 0, kind: input, shape index: {}]
  %s1 = inlined_call_operand.hbm [shape: f32[32,35], index: 1, kind: input, shape index: {}]
  %s2 = inlined_call_operand.hbm [shape: f32[2,16,16], index: 2, kind: input, shape index: {}]
  %s3 = inlined_call_operand.hbm [shape: f32[32,32], index: 3, kind: input, shape index: {}]
  %s4 = inlined_call_operand.vmem [shape: f32[3,32], index: 4, kind: input, shape index: {}]
  %s5 = inlined_call_operand.hbm [shape: f32[16,32], index: 5, kind: output, shape index: {}]
  %s6 = sld [smem:[#allocation0]]
  $region42: #{tpu_custom_call.1} parent=0
    _
  %s8 = ssub.s32 1, %s6
  %s9 = scalar_select 0, %s8, %s6
  $region1: #{tpu_custom_call.1} parent=0
    #allocation2 [shape = 'u8[16384]{0}', space=vmem, size = 0x4000, scoped, tag = 'input window, operand 1, single buffered']
    #allocation3 [shape = 's32[1]{0}', space=sflag, size = 0x4, scoped, tag = 'scoped memory for tpu_custom_call.1']
    #allocation4 [shape = 's32[1]{0}', space=sflag, size = 0x4, scoped, tag = 'scoped memory for tpu_custom_call.1']
    #allocation5 [shape = 'u8[16384]{0}', space=vmem, size = 0x4000, scoped, tag = 'input window, operand 2, single buffered']
    #allocation6 [shape = 's32[1]{0}', space=sflag, size = 0x4, scoped, tag = 'scoped memory for tpu_custom_call.1']
    #allocation7 [shape = 'u8[16384]{0}', space=vmem, size = 0x4000, scoped, tag = 'input window, operand 3, single buffered']
    #allocation8 [shape = 'u8[8192]{0}', space=vmem, size = 0x2000, scoped, tag = 'output window, operand 0, single buffered']
    %10 = vsyncpa [#allocation3], 0
    %11 = vsyncpa [#allocation6], 0
    %12 = vsyncpa [#allocation4], 0
    // Predicated region
    $region2: #{tpu_custom_call.1} parent=1 // pred_check
      _
    $region3: #{tpu_custom_call.1} parent=1 // pred_check_branch
      %14 = sbr.rel (0) target = $region5
    $region4: #{tpu_custom_call.1} parent=1 // pred_region
      _
    $region5: #{tpu_custom_call.1} parent=1 // pred_fallthru
      _
    // Predicated region
    $region6: #{tpu_custom_call.1} parent=1 // pred_check
      _
    $region7: #{tpu_custom_call.1} parent=1 // pred_check_branch
      %16 = sbr.rel (0) target = $region9
    $region8: #{tpu_custom_call.1} parent=1 // pred_region
      %s18 = ssub.s32 512, 512
      %19 = vsyncadd [#allocation3], %s18
      %s20 = sshll.u32 [#allocation2], 4
      %s21 = int_to_ptr.vmem [resolvable:$true] %s20
      %26 = dma.hbm_to_vmem [thread:$0]  %s1, 512, %s21, [#allocation3], 128, 128, 8
    $region9: #{tpu_custom_call.1} parent=1 // pred_fallthru
      _
    // Predicated region
    $region10: #{tpu_custom_call.1} parent=1 // pred_check
      _
    $region11: #{tpu_custom_call.1} parent=1 // pred_check_branch
      %28 = sbr.rel (0) target = $region13
    $region12: #{tpu_custom_call.1} parent=1 // pred_region
      %s30 = ssub.s32 512, 512
      %31 = vsyncadd [#allocation6], %s30
      %s32 = sshll.u32 [#allocation5], 4
      %s33 = int_to_ptr.vmem [resolvable:$true] %s32
      %38 = dma.hbm_to_vmem [thread:$0]  %s2, 512, %s33, [#allocation6], 128, 128, 8
    $region13: #{tpu_custom_call.1} parent=1 // pred_fallthru
      _
    // Predicated region
    $region14: #{tpu_custom_call.1} parent=1 // pred_check
      _
    $region15: #{tpu_custom_call.1} parent=1 // pred_check_branch
      %40 = sbr.rel (0) target = $region17
    $region16: #{tpu_custom_call.1} parent=1 // pred_region
      %s42 = ssub.s32 512, 512
      %43 = vsyncadd [#allocation6], %s42
      %s44 = sshll.u32 [#allocation7], 4
      %s45 = int_to_ptr.vmem [resolvable:$true] %s44
      %50 = dma.hbm_to_vmem [thread:$0]  %s3, 512, %s45, [#allocation6], 128, 128, 8
    $region17: #{tpu_custom_call.1} parent=1 // pred_fallthru
      _
    // Predicated region
    $region18: #{tpu_custom_call.1} parent=1 // pred_check
      _
    $region19: #{tpu_custom_call.1} parent=1 // pred_check_branch
      %52 = sbr.rel (0) target = $region21
    $region20: #{tpu_custom_call.1} parent=1 // pred_region
      _
    $region21: #{tpu_custom_call.1} parent=1 // pred_fallthru
      _
    // Predicated region
    $region22: #{tpu_custom_call.1} parent=1 // pred_check
      _
    $region23: #{tpu_custom_call.1} parent=1 // pred_check_branch
      %54 = sbr.rel (0) target = $region25
    $region24: #{tpu_custom_call.1} parent=1 // pred_region
      %55 = dma.done [#allocation3], 512
    $region25: #{tpu_custom_call.1} parent=1 // pred_fallthru
      _
    // Predicated region
    $region26: #{tpu_custom_call.1} parent=1 // pred_check
      _
    $region27: #{tpu_custom_call.1} parent=1 // pred_check_branch
      %57 = sbr.rel (0) target = $region29
    $region28: #{tpu_custom_call.1} parent=1 // pred_region
      %58 = dma.done [#allocation6], 512
    $region29: #{tpu_custom_call.1} parent=1 // pred_fallthru
      _
    // Predicated region
    $region30: #{tpu_custom_call.1} parent=1 // pred_check
      _
    $region31: #{tpu_custom_call.1} parent=1 // pred_check_branch
      %60 = sbr.rel (0) target = $region33
    $region32: #{tpu_custom_call.1} parent=1 // pred_region
      %61 = dma.done [#allocation6], 512
    $region33: #{tpu_custom_call.1} parent=1 // pred_fallthru
      _
    %v62 = vld [vmem:[%s0] sm:$0xff]
    %v63 = vld [vmem:[%s0 + $0x8] sm:$0xff]
    %v64 = vlaneseq
    %v65 = vand.u32 %v64, 127
    %66 = vset.pattern.permute.xlu0 0
    %67 = vperm.xlu0 %66, %v62
    %v68 = vpop.permute.xlu0 %67
    %69 = vset.pattern.permute.xlu0 0
    %70 = vperm.xlu0 %69, %v63
    %v71 = vpop.permute.xlu0 %70
    %vm72 = vcmp.eq.s32.totalorder %v65, %v68
    %vm73 = vcmp.eq.s32.totalorder %v65, %v71
    %v74 = vsel %vm72, 1, 0
    %v75 = vsel %vm73, 1, 0
    %v76 = vcvt.s32.f32 %v74
    %v77 = vcvt.s32.f32 %v75
    %v78 = vld [vmem:[#allocation2] sm:$0xff]
    %v79 = vld [vmem:[#allocation2 + $0x8] sm:$0xff]
    %v80 = vld [vmem:[#allocation2 + $0x10] sm:$0xff]
    %v81 = vld [vmem:[#allocation2 + $0x18] sm:$0xff]
    %vm82 = vcmask 261120
    %v84 = vsel %vm82, %v76, 0
    %v87 = vsel %vm82, %v77, 0
    %89 = vmatprep.subr.mxu0 0.0
    %90 = vmatpush1.msra.mxu0 0.0
    %91 = vmatprep.subr.mxu0 0.0
    %92 = vmatpush1.msra.mxu0 0.0
    %93 = vmatprep.subr.mxu0 0.0
    %94 = vmatpush1.msra.mxu0 0.0
    %95 = vmatprep.subr.mxu0 0.0
    %96 = vmatpush1.msra.mxu0 0.0
    %97 = vmatprep.subr.mxu0 0.0
    %98 = vmatpush1.msra.mxu0 0.0
    %99 = vmatprep.subr.mxu0 0.0
    %100 = vmatpush1.msra.mxu0 0.0
    %101 = vmatprep.subr.mxu0 0.0
    %102 = vmatpush1.msra.mxu0 0.0
    %103 = vmatprep.subr.mxu0 0.0
    %104 = vmatpush1.msra.mxu0 0.0
    %105 = vmatprep.subr.mxu0 0.0
    %106 = vmatpush1.msra.mxu0 0.0
    %107 = vmatprep.subr.mxu0 0.0
    %108 = vmatpush1.msra.mxu0 0.0
    %109 = vmatprep.subr.mxu0 0.0
    %110 = vmatpush1.msra.mxu0 0.0
    %111 = vmatprep.subr.mxu0 0.0
    %112 = vmatpush1.msra.mxu0 0.0
    %113 = vmatprep.subr.mxu0 0.0
    %v114 = vand.u32 %v81, 4294901760
    %115 = vmatpush1.msra.mxu0 %v114
    %116 = vmatprep.subr.mxu0 0.0
    %v117 = vand.u32 %v80, 4294901760
    %118 = vmatpush1.msra.mxu0 %v117
    %119 = vmatprep.subr.mxu0 0.0
    %v120 = vand.u32 %v79, 4294901760
    %121 = vmatpush1.msra.mxu0 %v120
    %122 = vmatprep.subr.mxu0 0.0
    %v123 = vand.u32 %v78, 4294901760
    %124 = vmatpush1.msra.mxu0 %v123
    %125 = vmatprep.subr.mxu0 0.0
    %126 = vmatpush2.msra.mxu0 0.0
    %127 = vmatprep.subr.mxu0 0.0
    %128 = vmatpush2.msra.mxu0 0.0
    %129 = vmatprep.subr.mxu0 0.0
    %130 = vmatpush2.msra.mxu0 0.0
    %131 = vmatprep.subr.mxu0 0.0
    %132 = vmatpush2.msra.mxu0 0.0
    %133 = vmatprep.subr.mxu0 0.0
    %134 = vmatpush2.msra.mxu0 0.0
    %135 = vmatprep.subr.mxu0 0.0
    %136 = vmatpush2.msra.mxu0 0.0
    %137 = vmatprep.subr.mxu0 0.0
    %138 = vmatpush2.msra.mxu0 0.0
    %139 = vmatprep.subr.mxu0 0.0
    %140 = vmatpush2.msra.mxu0 0.0
    %141 = vmatprep.subr.mxu0 0.0
    %142 = vmatpush2.msra.mxu0 0.0
    %143 = vmatprep.subr.mxu0 0.0
    %144 = vmatpush2.msra.mxu0 0.0
    %145 = vmatprep.subr.mxu0 0.0
    %146 = vmatpush2.msra.mxu0 0.0
    %147 = vmatprep.subr.mxu0 0.0
    %148 = vmatpush2.msra.mxu0 0.0
    %149 = vmatprep.subr.mxu0 0.0
    %150 = vmatpush2.msra.mxu0 0.0
    %151 = vmatprep.subr.mxu0 0.0
    %152 = vmatpush2.msra.mxu0 0.0
    %153 = vmatprep.subr.mxu0 0.0
    %154 = vmatpush2.msra.mxu0 0.0
    %155 = vmatprep.subr.mxu0 0.0
    %156 = vmatpush2.msra.mxu0 0.0
    %157 = vmatprep.mubr.f32.mxu0 0.0
    %v158 = vand.u32 %v84, 4294901760
    %v159 = vsub.f32 %v84, %v158
    %v160 = vand.u32 %v159, 4294901760
    %v161 = vsub.f32 %v159, %v160
    %v162 = vand.u32 %v161, 4294901760
    %163 = vmatmul.mubr.f32.gmra.mxu0 %v162
    %v164 = vpop.f32.mrf.mxu0
    %v165 = vadd.f32 0.0, %v164
    %v166 = vpop.f32.mrf.mxu0
    %167 = vmatprep.mubr.f32.mxu0 0.0
    %v168 = vand.u32 %v87, 4294901760
    %v169 = vsub.f32 %v87, %v168
    %v170 = vand.u32 %v169, 4294901760
    %v171 = vsub.f32 %v169, %v170
    %v172 = vand.u32 %v171, 4294901760
    %173 = vmatmul.mubr.f32.gmra.mxu0 %v172
    %v174 = vpop.f32.mrf.mxu0
    %v175 = vadd.f32 0.0, %v174
    %v176 = vpop.f32.mrf.mxu0
    %177 = vdwg.mxu0
    %178 = vmatprep.subr.mxu0 0.0
    %179 = vmatpush1.msra.mxu0 0.0
    %180 = vmatprep.subr.mxu0 0.0
    %181 = vmatpush1.msra.mxu0 0.0
    %182 = vmatprep.subr.mxu0 0.0
    %183 = vmatpush1.msra.mxu0 0.0
    %184 = vmatprep.subr.mxu0 0.0
    %185 = vmatpush1.msra.mxu0 0.0
    %186 = vmatprep.subr.mxu0 0.0
    %187 = vmatpush1.msra.mxu0 0.0
    %188 = vmatprep.subr.mxu0 0.0
    %189 = vmatpush1.msra.mxu0 0.0
    %190 = vmatprep.subr.mxu0 0.0
    %191 = vmatpush1.msra.mxu0 0.0
    %192 = vmatprep.subr.mxu0 0.0
    %193 = vmatpush1.msra.mxu0 0.0
    %194 = vmatprep.subr.mxu0 0.0
    %195 = vmatpush1.msra.mxu0 0.0
    %196 = vmatprep.subr.mxu0 0.0
    %197 = vmatpush1.msra.mxu0 0.0
    %198 = vmatprep.subr.mxu0 0.0
    %199 = vmatpush1.msra.mxu0 0.0
    %200 = vmatprep.subr.mxu0 0.0
    %201 = vmatpush1.msra.mxu0 0.0
    %202 = vmatprep.subr.mxu0 0.0
    %v203 = vand.u32 %v81, 4294901760
    %v204 = vsub.f32 %v81, %v203
    %v205 = vand.u32 %v204, 4294901760
    %v206 = vsub.f32 %v204, %v205
    %v207 = vand.u32 %v206, 4294901760
    %208 = vmatpush1.msra.mxu0 %v207
    %209 = vmatprep.subr.mxu0 0.0
    %v210 = vand.u32 %v80, 4294901760
    %v211 = vsub.f32 %v80, %v210
    %v212 = vand.u32 %v211, 4294901760
    %v213 = vsub.f32 %v211, %v212
    %v214 = vand.u32 %v213, 4294901760
    %215 = vmatpush1.msra.mxu0 %v214
    %216 = vmatprep.subr.mxu0 0.0
    %v217 = vand.u32 %v79, 4294901760
    %v218 = vsub.f32 %v79, %v217
    %v219 = vand.u32 %v218, 4294901760
    %v220 = vsub.f32 %v218, %v219
    %v221 = vand.u32 %v220, 4294901760
    %222 = vmatpush1.msra.mxu0 %v221
    %223 = vmatprep.subr.mxu0 0.0
    %v224 = vand.u32 %v78, 4294901760
    %v225 = vsub.f32 %v78, %v224
    %v226 = vand.u32 %v225, 4294901760
    %v227 = vsub.f32 %v225, %v226
    %v228 = vand.u32 %v227, 4294901760
    %229 = vmatpush1.msra.mxu0 %v228
    %230 = vmatprep.subr.mxu0 0.0
    %231 = vmatpush2.msra.mxu0 0.0
    %232 = vmatprep.subr.mxu0 0.0
    %233 = vmatpush2.msra.mxu0 0.0
    %234 = vmatprep.subr.mxu0 0.0
    %235 = vmatpush2.msra.mxu0 0.0
    %236 = vmatprep.subr.mxu0 0.0
    %237 = vmatpush2.msra.mxu0 0.0
    %238 = vmatprep.subr.mxu0 0.0
    %239 = vmatpush2.msra.mxu0 0.0
    %240 = vmatprep.subr.mxu0 0.0
    %241 = vmatpush2.msra.mxu0 0.0
    %242 = vmatprep.subr.mxu0 0.0
    %243 = vmatpush2.msra.mxu0 0.0
    %244 = vmatprep.subr.mxu0 0.0
    %245 = vmatpush2.msra.mxu0 0.0
    %246 = vmatprep.subr.mxu0 0.0
    %247 = vmatpush2.msra.mxu0 0.0
    %248 = vmatprep.subr.mxu0 0.0
    %249 = vmatpush2.msra.mxu0 0.0
    %250 = vmatprep.subr.mxu0 0.0
    %251 = vmatpush2.msra.mxu0 0.0
    %252 = vmatprep.subr.mxu0 0.0
    %253 = vmatpush2.msra.mxu0 0.0
    %254 = vmatprep.subr.mxu0 0.0
    %255 = vmatpush2.msra.mxu0 0.0
    %256 = vmatprep.subr.mxu0 0.0
    %257 = vmatpush2.msra.mxu0 0.0
    %258 = vmatprep.subr.mxu0 0.0
    %259 = vmatpush2.msra.mxu0 0.0
    %260 = vmatprep.subr.mxu0 0.0
    %261 = vmatpush2.msra.mxu0 0.0
    %262 = vmatprep.mubr.f32.mxu0 0.0
    %v263 = vand.u32 %v84, 4294901760
    %264 = vmatmul.mubr.f32.gmra.mxu0 %v263
    %v265 = vpop.f32.mrf.mxu0
    %v266 = vadd.f32 %v165, %v265
    %v267 = vpop.f32.mrf.mxu0
    %268 = vmatprep.mubr.f32.mxu0 0.0
    %v269 = vand.u32 %v87, 4294901760
    %270 = vmatmul.mubr.f32.gmra.mxu0 %v269
    %v271 = vpop.f32.mrf.mxu0
    %v272 = vadd.f32 %v175, %v271
    %v273 = vpop.f32.mrf.mxu0
    %274 = vdwg.mxu0
    %275 = vmatprep.subr.mxu0 0.0
    %276 = vmatpush1.msra.mxu0 0.0
    %277 = vmatprep.subr.mxu0 0.0
    %278 = vmatpush1.msra.mxu0 0.0
    %279 = vmatprep.subr.mxu0 0.0
    %280 = vmatpush1.msra.mxu0 0.0
    %281 = vmatprep.subr.mxu0 0.0
    %282 = vmatpush1.msra.mxu0 0.0
    %283 = vmatprep.subr.mxu0 0.0
    %284 = vmatpush1.msra.mxu0 0.0
    %285 = vmatprep.subr.mxu0 0.0
    %286 = vmatpush1.msra.mxu0 0.0
    %287 = vmatprep.subr.mxu0 0.0
    %288 = vmatpush1.msra.mxu0 0.0
    %289 = vmatprep.subr.mxu0 0.0
    %290 = vmatpush1.msra.mxu0 0.0
    %291 = vmatprep.subr.mxu0 0.0
    %292 = vmatpush1.msra.mxu0 0.0
    %293 = vmatprep.subr.mxu0 0.0
    %294 = vmatpush1.msra.mxu0 0.0
    %295 = vmatprep.subr.mxu0 0.0
    %296 = vmatpush1.msra.mxu0 0.0
    %297 = vmatprep.subr.mxu0 0.0
    %298 = vmatpush1.msra.mxu0 0.0
    %299 = vmatprep.subr.mxu0 0.0
    %v300 = vand.u32 %v81, 4294901760
    %v301 = vsub.f32 %v81, %v300
    %302 = vmatpush1.msra.mxu0 %v301
    %303 = vmatprep.subr.mxu0 0.0
    %v304 = vand.u32 %v80, 4294901760
    %v305 = vsub.f32 %v80, %v304
    %306 = vmatpush1.msra.mxu0 %v305
    %307 = vmatprep.subr.mxu0 0.0
    %v308 = vand.u32 %v79, 4294901760
    %v309 = vsub.f32 %v79, %v308
    %310 = vmatpush1.msra.mxu0 %v309
    %311 = vmatprep.subr.mxu0 0.0
    %v312 = vand.u32 %v78, 4294901760
    %v313 = vsub.f32 %v78, %v312
    %314 = vmatpush1.msra.mxu0 %v313
    %315 = vmatprep.subr.mxu0 0.0
    %316 = vmatpush2.msra.mxu0 0.0
    %317 = vmatprep.subr.mxu0 0.0
    %318 = vmatpush2.msra.mxu0 0.0
    %319 = vmatprep.subr.mxu0 0.0
    %320 = vmatpush2.msra.mxu0 0.0
    %321 = vmatprep.subr.mxu0 0.0
    %322 = vmatpush2.msra.mxu0 0.0
    %323 = vmatprep.subr.mxu0 0.0
    %324 = vmatpush2.msra.mxu0 0.0
    %325 = vmatprep.subr.mxu0 0.0
    %326 = vmatpush2.msra.mxu0 0.0
    %327 = vmatprep.subr.mxu0 0.0
    %328 = vmatpush2.msra.mxu0 0.0
    %329 = vmatprep.subr.mxu0 0.0
    %330 = vmatpush2.msra.mxu0 0.0
    %331 = vmatprep.subr.mxu0 0.0
    %332 = vmatpush2.msra.mxu0 0.0
    %333 = vmatprep.subr.mxu0 0.0
    %334 = vmatpush2.msra.mxu0 0.0
    %335 = vmatprep.subr.mxu0 0.0
    %336 = vmatpush2.msra.mxu0 0.0
    %337 = vmatprep.subr.mxu0 0.0
    %338 = vmatpush2.msra.mxu0 0.0
    %339 = vmatprep.subr.mxu0 0.0
    %340 = vmatpush2.msra.mxu0 0.0
    %341 = vmatprep.subr.mxu0 0.0
    %342 = vmatpush2.msra.mxu0 0.0
    %343 = vmatprep.subr.mxu0 0.0
    %344 = vmatpush2.msra.mxu0 0.0
    %345 = vmatprep.subr.mxu0 0.0
    %346 = vmatpush2.msra.mxu0 0.0
    %347 = vmatprep.mubr.f32.mxu0 0.0
    %v348 = vand.u32 %v84, 4294901760
    %v349 = vsub.f32 %v84, %v348
    %350 = vmatmul.mubr.f32.gmra.mxu0 %v349
    %v351 = vpop.f32.mrf.mxu0
    %v352 = vadd.f32 %v266, %v351
    %v353 = vpop.f32.mrf.mxu0
    %354 = vmatprep.mubr.f32.mxu0 0.0
    %v355 = vand.u32 %v87, 4294901760
    %v356 = vsub.f32 %v87, %v355
    %357 = vmatmul.mubr.f32.gmra.mxu0 %v356
    %v358 = vpop.f32.mrf.mxu0
    %v359 = vadd.f32 %v272, %v358
    %v360 = vpop.f32.mrf.mxu0
    %361 = vdwg.mxu0
    %362 = vmatprep.subr.mxu0 0.0
    %363 = vmatpush1.msra.mxu0 0.0
    %364 = vmatprep.subr.mxu0 0.0
    %365 = vmatpush1.msra.mxu0 0.0
    %366 = vmatprep.subr.mxu0 0.0
    %367 = vmatpush1.msra.mxu0 0.0
    %368 = vmatprep.subr.mxu0 0.0
    %369 = vmatpush1.msra.mxu0 0.0
    %370 = vmatprep.subr.mxu0 0.0
    %371 = vmatpush1.msra.mxu0 0.0
    %372 = vmatprep.subr.mxu0 0.0
    %373 = vmatpush1.msra.mxu0 0.0
    %374 = vmatprep.subr.mxu0 0.0
    %375 = vmatpush1.msra.mxu0 0.0
    %376 = vmatprep.subr.mxu0 0.0
    %377 = vmatpush1.msra.mxu0 0.0
    %378 = vmatprep.subr.mxu0 0.0
    %379 = vmatpush1.msra.mxu0 0.0
    %380 = vmatprep.subr.mxu0 0.0
    %381 = vmatpush1.msra.mxu0 0.0
    %382 = vmatprep.subr.mxu0 0.0
    %383 = vmatpush1.msra.mxu0 0.0
    %384 = vmatprep.subr.mxu0 0.0
    %385 = vmatpush1.msra.mxu0 0.0
    %386 = vmatprep.subr.mxu0 0.0
    %v387 = vand.u32 %v81, 4294901760
    %388 = vmatpush1.msra.mxu0 %v387
    %389 = vmatprep.subr.mxu0 0.0
    %v390 = vand.u32 %v80, 4294901760
    %391 = vmatpush1.msra.mxu0 %v390
    %392 = vmatprep.subr.mxu0 0.0
    %v393 = vand.u32 %v79, 4294901760
    %394 = vmatpush1.msra.mxu0 %v393
    %395 = vmatprep.subr.mxu0 0.0
    %v396 = vand.u32 %v78, 4294901760
    %397 = vmatpush1.msra.mxu0 %v396
    %398 = vmatprep.subr.mxu0 0.0
    %399 = vmatpush2.msra.mxu0 0.0
    %400 = vmatprep.subr.mxu0 0.0
    %401 = vmatpush2.msra.mxu0 0.0
    %402 = vmatprep.subr.mxu0 0.0
    %403 = vmatpush2.msra.mxu0 0.0
    %404 = vmatprep.subr.mxu0 0.0
    %405 = vmatpush2.msra.mxu0 0.0
    %406 = vmatprep.subr.mxu0 0.0
    %407 = vmatpush2.msra.mxu0 0.0
    %408 = vmatprep.subr.mxu0 0.0
    %409 = vmatpush2.msra.mxu0 0.0
    %410 = vmatprep.subr.mxu0 0.0
    %411 = vmatpush2.msra.mxu0 0.0
    %412 = vmatprep.subr.mxu0 0.0
    %413 = vmatpush2.msra.mxu0 0.0
    %414 = vmatprep.subr.mxu0 0.0
    %415 = vmatpush2.msra.mxu0 0.0
    %416 = vmatprep.subr.mxu0 0.0
    %417 = vmatpush2.msra.mxu0 0.0
    %418 = vmatprep.subr.mxu0 0.0
    %419 = vmatpush2.msra.mxu0 0.0
    %420 = vmatprep.subr.mxu0 0.0
    %421 = vmatpush2.msra.mxu0 0.0
    %422 = vmatprep.subr.mxu0 0.0
    %423 = vmatpush2.msra.mxu0 0.0
    %424 = vmatprep.subr.mxu0 0.0
    %425 = vmatpush2.msra.mxu0 0.0
    %426 = vmatprep.subr.mxu0 0.0
    %427 = vmatpush2.msra.mxu0 0.0
    %428 = vmatprep.subr.mxu0 0.0
    %429 = vmatpush2.msra.mxu0 0.0
    %430 = vmatprep.mubr.f32.mxu0 0.0
    %v431 = vand.u32 %v84, 4294901760
    %v432 = vsub.f32 %v84, %v431
    %v433 = vand.u32 %v432, 4294901760
    %434 = vmatmul.mubr.f32.gmra.mxu0 %v433
    %v435 = vpop.f32.mrf.mxu0
    %v436 = vadd.f32 %v352, %v435
    %v437 = vpop.f32.mrf.mxu0
    %438 = vmatprep.mubr.f32.mxu0 0.0
    %v439 = vand.u32 %v87, 4294901760
    %v440 = vsub.f32 %v87, %v439
    %v441 = vand.u32 %v440, 4294901760
    %442 = vmatmul.mubr.f32.gmra.mxu0 %v441
    %v443 = vpop.f32.mrf.mxu0
    %v444 = vadd.f32 %v359, %v443
    %v445 = vpop.f32.mrf.mxu0
    %446 = vdwg.mxu0
    %447 = vmatprep.subr.mxu0 0.0
    %448 = vmatpush1.msra.mxu0 0.0
    %449 = vmatprep.subr.mxu0 0.0
    %450 = vmatpush1.msra.mxu0 0.0
    %451 = vmatprep.subr.mxu0 0.0
    %452 = vmatpush1.msra.mxu0 0.0
    %453 = vmatprep.subr.mxu0 0.0
    %454 = vmatpush1.msra.mxu0 0.0
    %455 = vmatprep.subr.mxu0 0.0
    %456 = vmatpush1.msra.mxu0 0.0
    %457 = vmatprep.subr.mxu0 0.0
    %458 = vmatpush1.msra.mxu0 0.0
    %459 = vmatprep.subr.mxu0 0.0
    %460 = vmatpush1.msra.mxu0 0.0
    %461 = vmatprep.subr.mxu0 0.0
    %462 = vmatpush1.msra.mxu0 0.0
    %463 = vmatprep.subr.mxu0 0.0
    %464 = vmatpush1.msra.mxu0 0.0
    %465 = vmatprep.subr.mxu0 0.0
    %466 = vmatpush1.msra.mxu0 0.0
    %467 = vmatprep.subr.mxu0 0.0
    %468 = vmatpush1.msra.mxu0 0.0
    %469 = vmatprep.subr.mxu0 0.0
    %470 = vmatpush1.msra.mxu0 0.0
    %471 = vmatprep.subr.mxu0 0.0
    %v472 = vand.u32 %v81, 4294901760
    %v473 = vsub.f32 %v81, %v472
    %v474 = vand.u32 %v473, 4294901760
    %475 = vmatpush1.msra.mxu0 %v474
    %476 = vmatprep.subr.mxu0 0.0
    %v477 = vand.u32 %v80, 4294901760
    %v478 = vsub.f32 %v80, %v477
    %v479 = vand.u32 %v478, 4294901760
    %480 = vmatpush1.msra.mxu0 %v479
    %481 = vmatprep.subr.mxu0 0.0
    %v482 = vand.u32 %v79, 4294901760
    %v483 = vsub.f32 %v79, %v482
    %v484 = vand.u32 %v483, 4294901760
    %485 = vmatpush1.msra.mxu0 %v484
    %486 = vmatprep.subr.mxu0 0.0
    %v487 = vand.u32 %v78, 4294901760
    %v488 = vsub.f32 %v78, %v487
    %v489 = vand.u32 %v488, 4294901760
    %490 = vmatpush1.msra.mxu0 %v489
    %491 = vmatprep.subr.mxu0 0.0
    %492 = vmatpush2.msra.mxu0 0.0
    %493 = vmatprep.subr.mxu0 0.0
    %494 = vmatpush2.msra.mxu0 0.0
    %495 = vmatprep.subr.mxu0 0.0
    %496 = vmatpush2.msra.mxu0 0.0
    %497 = vmatprep.subr.mxu0 0.0
    %498 = vmatpush2.msra.mxu0 0.0
    %499 = vmatprep.subr.mxu0 0.0
    %500 = vmatpush2.msra.mxu0 0.0
    %501 = vmatprep.subr.mxu0 0.0
    %502 = vmatpush2.msra.mxu0 0.0
    %503 = vmatprep.subr.mxu0 0.0
    %504 = vmatpush2.msra.mxu0 0.0
    %505 = vmatprep.subr.mxu0 0.0
    %506 = vmatpush2.msra.mxu0 0.0
    %507 = vmatprep.subr.mxu0 0.0
    %508 = vmatpush2.msra.mxu0 0.0
    %509 = vmatprep.subr.mxu0 0.0
    %510 = vmatpush2.msra.mxu0 0.0
    %511 = vmatprep.subr.mxu0 0.0
    %512 = vmatpush2.msra.mxu0 0.0
    %513 = vmatprep.subr.mxu0 0.0
    %514 = vmatpush2.msra.mxu0 0.0
    %515 = vmatprep.subr.mxu0 0.0
    %516 = vmatpush2.msra.mxu0 0.0
    %517 = vmatprep.subr.mxu0 0.0
    %518 = vmatpush2.msra.mxu0 0.0
    %519 = vmatprep.subr.mxu0 0.0
    %520 = vmatpush2.msra.mxu0 0.0
    %521 = vmatprep.subr.mxu0 0.0
    %522 = vmatpush2.msra.mxu0 0.0
    %523 = vmatprep.mubr.f32.mxu0 0.0
    %v524 = vand.u32 %v84, 4294901760
    %525 = vmatmul.mubr.f32.gmra.mxu0 %v524
    %v526 = vpop.f32.mrf.mxu0
    %v527 = vadd.f32 %v436, %v526
    %v528 = vpop.f32.mrf.mxu0
    %529 = vmatprep.mubr.f32.mxu0 0.0
    %v530 = vand.u32 %v87, 4294901760
    %531 = vmatmul.mubr.f32.gmra.mxu0 %v530
    %v532 = vpop.f32.mrf.mxu0
    %v533 = vadd.f32 %v444, %v532
    %v534 = vpop.f32.mrf.mxu0
    %535 = vdwg.mxu0
    %536 = vmatprep.subr.mxu0 0.0
    %537 = vmatpush1.msra.mxu0 0.0
    %538 = vmatprep.subr.mxu0 0.0
    %539 = vmatpush1.msra.mxu0 0.0
    %540 = vmatprep.subr.mxu0 0.0
    %541 = vmatpush1.msra.mxu0 0.0
    %542 = vmatprep.subr.mxu0 0.0
    %543 = vmatpush1.msra.mxu0 0.0
    %544 = vmatprep.subr.mxu0 0.0
    %545 = vmatpush1.msra.mxu0 0.0
    %546 = vmatprep.subr.mxu0 0.0
    %547 = vmatpush1.msra.mxu0 0.0
    %548 = vmatprep.subr.mxu0 0.0
    %549 = vmatpush1.msra.mxu0 0.0
    %550 = vmatprep.subr.mxu0 0.0
    %551 = vmatpush1.msra.mxu0 0.0
    %552 = vmatprep.subr.mxu0 0.0
    %553 = vmatpush1.msra.mxu0 0.0
    %554 = vmatprep.subr.mxu0 0.0
    %555 = vmatpush1.msra.mxu0 0.0
    %556 = vmatprep.subr.mxu0 0.0
    %557 = vmatpush1.msra.mxu0 0.0
    %558 = vmatprep.subr.mxu0 0.0
    %559 = vmatpush1.msra.mxu0 0.0
    %560 = vmatprep.subr.mxu0 0.0
    %v561 = vand.u32 %v81, 4294901760
    %562 = vmatpush1.msra.mxu0 %v561
    %563 = vmatprep.subr.mxu0 0.0
    %v564 = vand.u32 %v80, 4294901760
    %565 = vmatpush1.msra.mxu0 %v564
    %566 = vmatprep.subr.mxu0 0.0
    %v567 = vand.u32 %v79, 4294901760
    %568 = vmatpush1.msra.mxu0 %v567
    %569 = vmatprep.subr.mxu0 0.0
    %v570 = vand.u32 %v78, 4294901760
    %571 = vmatpush1.msra.mxu0 %v570
    %572 = vmatprep.subr.mxu0 0.0
    %573 = vmatpush2.msra.mxu0 0.0
    %574 = vmatprep.subr.mxu0 0.0
    %575 = vmatpush2.msra.mxu0 0.0
    %576 = vmatprep.subr.mxu0 0.0
    %577 = vmatpush2.msra.mxu0 0.0
    %578 = vmatprep.subr.mxu0 0.0
    %579 = vmatpush2.msra.mxu0 0.0
    %580 = vmatprep.subr.mxu0 0.0
    %581 = vmatpush2.msra.mxu0 0.0
    %582 = vmatprep.subr.mxu0 0.0
    %583 = vmatpush2.msra.mxu0 0.0
    %584 = vmatprep.subr.mxu0 0.0
    %585 = vmatpush2.msra.mxu0 0.0
    %586 = vmatprep.subr.mxu0 0.0
    %587 = vmatpush2.msra.mxu0 0.0
    %588 = vmatprep.subr.mxu0 0.0
    %589 = vmatpush2.msra.mxu0 0.0
    %590 = vmatprep.subr.mxu0 0.0
    %591 = vmatpush2.msra.mxu0 0.0
    %592 = vmatprep.subr.mxu0 0.0
    %593 = vmatpush2.msra.mxu0 0.0
    %594 = vmatprep.subr.mxu0 0.0
    %595 = vmatpush2.msra.mxu0 0.0
    %596 = vmatprep.subr.mxu0 0.0
    %597 = vmatpush2.msra.mxu0 0.0
    %598 = vmatprep.subr.mxu0 0.0
    %599 = vmatpush2.msra.mxu0 0.0
    %600 = vmatprep.subr.mxu0 0.0
    %601 = vmatpush2.msra.mxu0 0.0
    %602 = vmatprep.subr.mxu0 0.0
    %603 = vmatpush2.msra.mxu0 0.0
    %604 = vmatprep.mubr.f32.mxu0 0.0
    %v605 = vand.u32 %v84, 4294901760
    %606 = vmatmul.mubr.f32.gmra.mxu0 %v605
    %v607 = vpop.f32.mrf.mxu0
    %v608 = vadd.f32 %v527, %v607
    %v609 = vpop.f32.mrf.mxu0
    %610 = vmatprep.mubr.f32.mxu0 0.0
    %v611 = vand.u32 %v87, 4294901760
    %612 = vmatmul.mubr.f32.gmra.mxu0 %v611
    %v613 = vpop.f32.mrf.mxu0
    %v614 = vadd.f32 %v533, %v613
    %v615 = vpop.f32.mrf.mxu0
    %616 = vdwg.mxu0
    %618 = vset.pattern.permute.xlu0 34
    %619 = vperm.xlu0 %618, %v608
    %v620 = vpop.permute.xlu0 %619
    %623 = vset.pattern.permute.xlu0 34
    %624 = vperm.xlu0 %623, %v614
    %v625 = vpop.permute.xlu0 %624
    %v627 = vmul.f32 %v620, %v608
    %v628 = vmul.f32 %v625, %v614
    %629 = vset.pattern.permute.xlu0 33
    %630 = vperm.xlu0 %629, %v608
    %v631 = vpop.permute.xlu0 %630
    %633 = vset.pattern.permute.xlu0 33
    %634 = vperm.xlu0 %633, %v614
    %v635 = vpop.permute.xlu0 %634
    %v637 = vmul.f32 %v631, %v608
    %v638 = vmul.f32 %v635, %v614
    %v639 = vld [vmem:[#allocation5] sm:$0xff]
    %v640 = vld [vmem:[#allocation5 + $0x8] sm:$0xff]
    %vm641 = vcmask 130048
    %v643 = vsel %vm641, %v639, 0
    %v646 = vsel %vm641, %v640, 0
    %648 = vmatprep.subr.mxu0 0.0
    %649 = vmatpush1.msra.mxu0 0.0
    %650 = vmatprep.subr.mxu0 0.0
    %651 = vmatpush1.msra.mxu0 0.0
    %652 = vmatprep.subr.mxu0 0.0
    %653 = vmatpush1.msra.mxu0 0.0
    %654 = vmatprep.subr.mxu0 0.0
    %655 = vmatpush1.msra.mxu0 0.0
    %656 = vmatprep.subr.mxu0 0.0
    %657 = vmatpush1.msra.mxu0 0.0
    %658 = vmatprep.subr.mxu0 0.0
    %659 = vmatpush1.msra.mxu0 0.0
    %660 = vmatprep.subr.mxu0 0.0
    %661 = vmatpush1.msra.mxu0 0.0
    %662 = vmatprep.subr.mxu0 0.0
    %663 = vmatpush1.msra.mxu0 0.0
    %664 = vmatprep.subr.mxu0 0.0
    %665 = vmatpush1.msra.mxu0 0.0
    %666 = vmatprep.subr.mxu0 0.0
    %667 = vmatpush1.msra.mxu0 0.0
    %668 = vmatprep.subr.mxu0 0.0
    %669 = vmatpush1.msra.mxu0 0.0
    %670 = vmatprep.subr.mxu0 0.0
    %671 = vmatpush1.msra.mxu0 0.0
    %672 = vmatprep.subr.mxu0 0.0
    %673 = vmatpush1.msra.mxu0 0.0
    %674 = vmatprep.subr.mxu0 0.0
    %675 = vmatpush1.msra.mxu0 0.0
    %676 = vmatprep.subr.mxu0 0.0
    %v677 = vand.u32 %v638, 4294901760
    %678 = vmatpush1.msra.mxu0 %v677
    %679 = vmatprep.subr.mxu0 0.0
    %v680 = vand.u32 %v637, 4294901760
    %681 = vmatpush1.msra.mxu0 %v680
    %682 = vmatprep.subr.mxu0 0.0
    %683 = vmatpush2.msra.mxu0 0.0
    %684 = vmatprep.subr.mxu0 0.0
    %685 = vmatpush2.msra.mxu0 0.0
    %686 = vmatprep.subr.mxu0 0.0
    %687 = vmatpush2.msra.mxu0 0.0
    %688 = vmatprep.subr.mxu0 0.0
    %689 = vmatpush2.msra.mxu0 0.0
    %690 = vmatprep.subr.mxu0 0.0
    %691 = vmatpush2.msra.mxu0 0.0
    %692 = vmatprep.subr.mxu0 0.0
    %693 = vmatpush2.msra.mxu0 0.0
    %694 = vmatprep.subr.mxu0 0.0
    %695 = vmatpush2.msra.mxu0 0.0
    %696 = vmatprep.subr.mxu0 0.0
    %697 = vmatpush2.msra.mxu0 0.0
    %698 = vmatprep.subr.mxu0 0.0
    %699 = vmatpush2.msra.mxu0 0.0
    %700 = vmatprep.subr.mxu0 0.0
    %701 = vmatpush2.msra.mxu0 0.0
    %702 = vmatprep.subr.mxu0 0.0
    %703 = vmatpush2.msra.mxu0 0.0
    %704 = vmatprep.subr.mxu0 0.0
    %705 = vmatpush2.msra.mxu0 0.0
    %706 = vmatprep.subr.mxu0 0.0
    %707 = vmatpush2.msra.mxu0 0.0
    %708 = vmatprep.subr.mxu0 0.0
    %709 = vmatpush2.msra.mxu0 0.0
    %710 = vmatprep.subr.mxu0 0.0
    %711 = vmatpush2.msra.mxu0 0.0
    %712 = vmatprep.subr.mxu0 0.0
    %713 = vmatpush2.msra.mxu0 0.0
    %714 = vmatprep.mubr.f32.mxu0 0.0
    %v715 = vand.u32 %v643, 4294901760
    %v716 = vsub.f32 %v643, %v715
    %v717 = vand.u32 %v716, 4294901760
    %v718 = vsub.f32 %v716, %v717
    %v719 = vand.u32 %v718, 4294901760
    %720 = vmatmul.mubr.f32.gmra.mxu0 %v719
    %v721 = vpop.f32.mrf.mxu0
    %v722 = vadd.f32 0.0, %v721
    %v723 = vpop.f32.mrf.mxu0
    %724 = vmatprep.mubr.f32.mxu0 0.0
    %v725 = vand.u32 %v646, 4294901760
    %v726 = vsub.f32 %v646, %v725
    %v727 = vand.u32 %v726, 4294901760
    %v728 = vsub.f32 %v726, %v727
    %v729 = vand.u32 %v728, 4294901760
    %730 = vmatmul.mubr.f32.gmra.mxu0 %v729
    %v731 = vpop.f32.mrf.mxu0
    %v732 = vadd.f32 0.0, %v731
    %v733 = vpop.f32.mrf.mxu0
    %734 = vdwg.mxu0
    %735 = vmatprep.subr.mxu0 0.0
    %736 = vmatpush1.msra.mxu0 0.0
    %737 = vmatprep.subr.mxu0 0.0
    %738 = vmatpush1.msra.mxu0 0.0
    %739 = vmatprep.subr.mxu0 0.0
    %740 = vmatpush1.msra.mxu0 0.0
    %741 = vmatprep.subr.mxu0 0.0
    %742 = vmatpush1.msra.mxu0 0.0
    %743 = vmatprep.subr.mxu0 0.0
    %744 = vmatpush1.msra.mxu0 0.0
    %745 = vmatprep.subr.mxu0 0.0
    %746 = vmatpush1.msra.mxu0 0.0
    %747 = vmatprep.subr.mxu0 0.0
    %748 = vmatpush1.msra.mxu0 0.0
    %749 = vmatprep.subr.mxu0 0.0
    %750 = vmatpush1.msra.mxu0 0.0
    %751 = vmatprep.subr.mxu0 0.0
    %752 = vmatpush1.msra.mxu0 0.0
    %753 = vmatprep.subr.mxu0 0.0
    %754 = vmatpush1.msra.mxu0 0.0
    %755 = vmatprep.subr.mxu0 0.0
    %756 = vmatpush1.msra.mxu0 0.0
    %757 = vmatprep.subr.mxu0 0.0
    %758 = vmatpush1.msra.mxu0 0.0
    %759 = vmatprep.subr.mxu0 0.0
    %760 = vmatpush1.msra.mxu0 0.0
    %761 = vmatprep.subr.mxu0 0.0
    %762 = vmatpush1.msra.mxu0 0.0
    %763 = vmatprep.subr.mxu0 0.0
    %v764 = vand.u32 %v638, 4294901760
    %v765 = vsub.f32 %v638, %v764
    %v766 = vand.u32 %v765, 4294901760
    %v767 = vsub.f32 %v765, %v766
    %v768 = vand.u32 %v767, 4294901760
    %769 = vmatpush1.msra.mxu0 %v768
    %770 = vmatprep.subr.mxu0 0.0
    %v771 = vand.u32 %v637, 4294901760
    %v772 = vsub.f32 %v637, %v771
    %v773 = vand.u32 %v772, 4294901760
    %v774 = vsub.f32 %v772, %v773
    %v775 = vand.u32 %v774, 4294901760
    %776 = vmatpush1.msra.mxu0 %v775
    %777 = vmatprep.subr.mxu0 0.0
    %778 = vmatpush2.msra.mxu0 0.0
    %779 = vmatprep.subr.mxu0 0.0
    %780 = vmatpush2.msra.mxu0 0.0
    %781 = vmatprep.subr.mxu0 0.0
    %782 = vmatpush2.msra.mxu0 0.0
    %783 = vmatprep.subr.mxu0 0.0
    %784 = vmatpush2.msra.mxu0 0.0
    %785 = vmatprep.subr.mxu0 0.0
    %786 = vmatpush2.msra.mxu0 0.0
    %787 = vmatprep.subr.mxu0 0.0
    %788 = vmatpush2.msra.mxu0 0.0
    %789 = vmatprep.subr.mxu0 0.0
    %790 = vmatpush2.msra.mxu0 0.0
    %791 = vmatprep.subr.mxu0 0.0
    %792 = vmatpush2.msra.mxu0 0.0
    %793 = vmatprep.subr.mxu0 0.0
    %794 = vmatpush2.msra.mxu0 0.0
    %795 = vmatprep.subr.mxu0 0.0
    %796 = vmatpush2.msra.mxu0 0.0
    %797 = vmatprep.subr.mxu0 0.0
    %798 = vmatpush2.msra.mxu0 0.0
    %799 = vmatprep.subr.mxu0 0.0
    %800 = vmatpush2.msra.mxu0 0.0
    %801 = vmatprep.subr.mxu0 0.0
    %802 = vmatpush2.msra.mxu0 0.0
    %803 = vmatprep.subr.mxu0 0.0
    %804 = vmatpush2.msra.mxu0 0.0
    %805 = vmatprep.subr.mxu0 0.0
    %806 = vmatpush2.msra.mxu0 0.0
    %807 = vmatprep.subr.mxu0 0.0
    %808 = vmatpush2.msra.mxu0 0.0
    %809 = vmatprep.mubr.f32.mxu0 0.0
    %v810 = vand.u32 %v643, 4294901760
    %811 = vmatmul.mubr.f32.gmra.mxu0 %v810
    %v812 = vpop.f32.mrf.mxu0
    %v813 = vadd.f32 %v722, %v812
    %v814 = vpop.f32.mrf.mxu0
    %815 = vmatprep.mubr.f32.mxu0 0.0
    %v816 = vand.u32 %v646, 4294901760
    %817 = vmatmul.mubr.f32.gmra.mxu0 %v816
    %v818 = vpop.f32.mrf.mxu0
    %v819 = vadd.f32 %v732, %v818
    %v820 = vpop.f32.mrf.mxu0
    %821 = vdwg.mxu0
    %822 = vmatprep.subr.mxu0 0.0
    %823 = vmatpush1.msra.mxu0 0.0
    %824 = vmatprep.subr.mxu0 0.0
    %825 = vmatpush1.msra.mxu0 0.0
    %826 = vmatprep.subr.mxu0 0.0
    %827 = vmatpush1.msra.mxu0 0.0
    %828 = vmatprep.subr.mxu0 0.0
    %829 = vmatpush1.msra.mxu0 0.0
    %830 = vmatprep.subr.mxu0 0.0
    %831 = vmatpush1.msra.mxu0 0.0
    %832 = vmatprep.subr.mxu0 0.0
    %833 = vmatpush1.msra.mxu0 0.0
    %834 = vmatprep.subr.mxu0 0.0
    %835 = vmatpush1.msra.mxu0 0.0
    %836 = vmatprep.subr.mxu0 0.0
    %837 = vmatpush1.msra.mxu0 0.0
    %838 = vmatprep.subr.mxu0 0.0
    %839 = vmatpush1.msra.mxu0 0.0
    %840 = vmatprep.subr.mxu0 0.0
    %841 = vmatpush1.msra.mxu0 0.0
    %842 = vmatprep.subr.mxu0 0.0
    %843 = vmatpush1.msra.mxu0 0.0
    %844 = vmatprep.subr.mxu0 0.0
    %845 = vmatpush1.msra.mxu0 0.0
    %846 = vmatprep.subr.mxu0 0.0
    %847 = vmatpush1.msra.mxu0 0.0
    %848 = vmatprep.subr.mxu0 0.0
    %849 = vmatpush1.msra.mxu0 0.0
    %850 = vmatprep.subr.mxu0 0.0
    %v851 = vand.u32 %v638, 4294901760
    %v852 = vsub.f32 %v638, %v851
    %853 = vmatpush1.msra.mxu0 %v852
    %854 = vmatprep.subr.mxu0 0.0
    %v855 = vand.u32 %v637, 4294901760
    %v856 = vsub.f32 %v637, %v855
    %857 = vmatpush1.msra.mxu0 %v856
    %858 = vmatprep.subr.mxu0 0.0
    %859 = vmatpush2.msra.mxu0 0.0
    %860 = vmatprep.subr.mxu0 0.0
    %861 = vmatpush2.msra.mxu0 0.0
    %862 = vmatprep.subr.mxu0 0.0
    %863 = vmatpush2.msra.mxu0 0.0
    %864 = vmatprep.subr.mxu0 0.0
    %865 = vmatpush2.msra.mxu0 0.0
    %866 = vmatprep.subr.mxu0 0.0
    %867 = vmatpush2.msra.mxu0 0.0
    %868 = vmatprep.subr.mxu0 0.0
    %869 = vmatpush2.msra.mxu0 0.0
    %870 = vmatprep.subr.mxu0 0.0
    %871 = vmatpush2.msra.mxu0 0.0
    %872 = vmatprep.subr.mxu0 0.0
    %873 = vmatpush2.msra.mxu0 0.0
    %874 = vmatprep.subr.mxu0 0.0
    %875 = vmatpush2.msra.mxu0 0.0
    %876 = vmatprep.subr.mxu0 0.0
    %877 = vmatpush2.msra.mxu0 0.0
    %878 = vmatprep.subr.mxu0 0.0
    %879 = vmatpush2.msra.mxu0 0.0
    %880 = vmatprep.subr.mxu0 0.0
    %881 = vmatpush2.msra.mxu0 0.0
    %882 = vmatprep.subr.mxu0 0.0
    %883 = vmatpush2.msra.mxu0 0.0
    %884 = vmatprep.subr.mxu0 0.0
    %885 = vmatpush2.msra.mxu0 0.0
    %886 = vmatprep.subr.mxu0 0.0
    %887 = vmatpush2.msra.mxu0 0.0
    %888 = vmatprep.subr.mxu0 0.0
    %889 = vmatpush2.msra.mxu0 0.0
    %890 = vmatprep.mubr.f32.mxu0 0.0
    %v891 = vand.u32 %v643, 4294901760
    %v892 = vsub.f32 %v643, %v891
    %893 = vmatmul.mubr.f32.gmra.mxu0 %v892
    %v894 = vpop.f32.mrf.mxu0
    %v895 = vadd.f32 %v813, %v894
    %v896 = vpop.f32.mrf.mxu0
    %897 = vmatprep.mubr.f32.mxu0 0.0
    %v898 = vand.u32 %v646, 4294901760
    %v899 = vsub.f32 %v646, %v898
    %900 = vmatmul.mubr.f32.gmra.mxu0 %v899
    %v901 = vpop.f32.mrf.mxu0
    %v902 = vadd.f32 %v819, %v901
    %v903 = vpop.f32.mrf.mxu0
    %904 = vdwg.mxu0
    %905 = vmatprep.subr.mxu0 0.0
    %906 = vmatpush1.msra.mxu0 0.0
    %907 = vmatprep.subr.mxu0 0.0
    %908 = vmatpush1.msra.mxu0 0.0
    %909 = vmatprep.subr.mxu0 0.0
    %910 = vmatpush1.msra.mxu0 0.0
    %911 = vmatprep.subr.mxu0 0.0
    %912 = vmatpush1.msra.mxu0 0.0
    %913 = vmatprep.subr.mxu0 0.0
    %914 = vmatpush1.msra.mxu0 0.0
    %915 = vmatprep.subr.mxu0 0.0
    %916 = vmatpush1.msra.mxu0 0.0
    %917 = vmatprep.subr.mxu0 0.0
    %918 = vmatpush1.msra.mxu0 0.0
    %919 = vmatprep.subr.mxu0 0.0
    %920 = vmatpush1.msra.mxu0 0.0
    %921 = vmatprep.subr.mxu0 0.0
    %922 = vmatpush1.msra.mxu0 0.0
    %923 = vmatprep.subr.mxu0 0.0
    %924 = vmatpush1.msra.mxu0 0.0
    %925 = vmatprep.subr.mxu0 0.0
    %926 = vmatpush1.msra.mxu0 0.0
    %927 = vmatprep.subr.mxu0 0.0
    %928 = vmatpush1.msra.mxu0 0.0
    %929 = vmatprep.subr.mxu0 0.0
    %930 = vmatpush1.msra.mxu0 0.0
    %931 = vmatprep.subr.mxu0 0.0
    %932 = vmatpush1.msra.mxu0 0.0
    %933 = vmatprep.subr.mxu0 0.0
    %v934 = vand.u32 %v638, 4294901760
    %935 = vmatpush1.msra.mxu0 %v934
    %936 = vmatprep.subr.mxu0 0.0
    %v937 = vand.u32 %v637, 4294901760
    %938 = vmatpush1.msra.mxu0 %v937
    %939 = vmatprep.subr.mxu0 0.0
    %940 = vmatpush2.msra.mxu0 0.0
    %941 = vmatprep.subr.mxu0 0.0
    %942 = vmatpush2.msra.mxu0 0.0
    %943 = vmatprep.subr.mxu0 0.0
    %944 = vmatpush2.msra.mxu0 0.0
    %945 = vmatprep.subr.mxu0 0.0
    %946 = vmatpush2.msra.mxu0 0.0
    %947 = vmatprep.subr.mxu0 0.0
    %948 = vmatpush2.msra.mxu0 0.0
    %949 = vmatprep.subr.mxu0 0.0
    %950 = vmatpush2.msra.mxu0 0.0
    %951 = vmatprep.subr.mxu0 0.0
    %952 = vmatpush2.msra.mxu0 0.0
    %953 = vmatprep.subr.mxu0 0.0
    %954 = vmatpush2.msra.mxu0 0.0
    %955 = vmatprep.subr.mxu0 0.0
    %956 = vmatpush2.msra.mxu0 0.0
    %957 = vmatprep.subr.mxu0 0.0
    %958 = vmatpush2.msra.mxu0 0.0
    %959 = vmatprep.subr.mxu0 0.0
    %960 = vmatpush2.msra.mxu0 0.0
    %961 = vmatprep.subr.mxu0 0.0
    %962 = vmatpush2.msra.mxu0 0.0
    %963 = vmatprep.subr.mxu0 0.0
    %964 = vmatpush2.msra.mxu0 0.0
    %965 = vmatprep.subr.mxu0 0.0
    %966 = vmatpush2.msra.mxu0 0.0
    %967 = vmatprep.subr.mxu0 0.0
    %968 = vmatpush2.msra.mxu0 0.0
    %969 = vmatprep.subr.mxu0 0.0
    %970 = vmatpush2.msra.mxu0 0.0
    %971 = vmatprep.mubr.f32.mxu0 0.0
    %v972 = vand.u32 %v643, 4294901760
    %v973 = vsub.f32 %v643, %v972
    %v974 = vand.u32 %v973, 4294901760
    %975 = vmatmul.mubr.f32.gmra.mxu0 %v974
    %v976 = vpop.f32.mrf.mxu0
    %v977 = vadd.f32 %v895, %v976
    %v978 = vpop.f32.mrf.mxu0
    %979 = vmatprep.mubr.f32.mxu0 0.0
    %v980 = vand.u32 %v646, 4294901760
    %v981 = vsub.f32 %v646, %v980
    %v982 = vand.u32 %v981, 4294901760
    %983 = vmatmul.mubr.f32.gmra.mxu0 %v982
    %v984 = vpop.f32.mrf.mxu0
    %v985 = vadd.f32 %v902, %v984
    %v986 = vpop.f32.mrf.mxu0
    %987 = vdwg.mxu0
    %988 = vmatprep.subr.mxu0 0.0
    %989 = vmatpush1.msra.mxu0 0.0
    %990 = vmatprep.subr.mxu0 0.0
    %991 = vmatpush1.msra.mxu0 0.0
    %992 = vmatprep.subr.mxu0 0.0
    %993 = vmatpush1.msra.mxu0 0.0
    %994 = vmatprep.subr.mxu0 0.0
    %995 = vmatpush1.msra.mxu0 0.0
    %996 = vmatprep.subr.mxu0 0.0
    %997 = vmatpush1.msra.mxu0 0.0
    %998 = vmatprep.subr.mxu0 0.0
    %999 = vmatpush1.msra.mxu0 0.0
    %1000 = vmatprep.subr.mxu0 0.0
    %1001 = vmatpush1.msra.mxu0 0.0
    %1002 = vmatprep.subr.mxu0 0.0
    %1003 = vmatpush1.msra.mxu0 0.0
    %1004 = vmatprep.subr.mxu0 0.0
    %1005 = vmatpush1.msra.mxu0 0.0
    %1006 = vmatprep.subr.mxu0 0.0
    %1007 = vmatpush1.msra.mxu0 0.0
    %1008 = vmatprep.subr.mxu0 0.0
    %1009 = vmatpush1.msra.mxu0 0.0
    %1010 = vmatprep.subr.mxu0 0.0
    %1011 = vmatpush1.msra.mxu0 0.0
    %1012 = vmatprep.subr.mxu0 0.0
    %1013 = vmatpush1.msra.mxu0 0.0
    %1014 = vmatprep.subr.mxu0 0.0
    %1015 = vmatpush1.msra.mxu0 0.0
    %1016 = vmatprep.subr.mxu0 0.0
    %v1017 = vand.u32 %v638, 4294901760
    %v1018 = vsub.f32 %v638, %v1017
    %v1019 = vand.u32 %v1018, 4294901760
    %1020 = vmatpush1.msra.mxu0 %v1019
    %1021 = vmatprep.subr.mxu0 0.0
    %v1022 = vand.u32 %v637, 4294901760
    %v1023 = vsub.f32 %v637, %v1022
    %v1024 = vand.u32 %v1023, 4294901760
    %1025 = vmatpush1.msra.mxu0 %v1024
    %1026 = vmatprep.subr.mxu0 0.0
    %1027 = vmatpush2.msra.mxu0 0.0
    %1028 = vmatprep.subr.mxu0 0.0
    %1029 = vmatpush2.msra.mxu0 0.0
    %1030 = vmatprep.subr.mxu0 0.0
    %1031 = vmatpush2.msra.mxu0 0.0
    %1032 = vmatprep.subr.mxu0 0.0
    %1033 = vmatpush2.msra.mxu0 0.0
    %1034 = vmatprep.subr.mxu0 0.0
    %1035 = vmatpush2.msra.mxu0 0.0
    %1036 = vmatprep.subr.mxu0 0.0
    %1037 = vmatpush2.msra.mxu0 0.0
    %1038 = vmatprep.subr.mxu0 0.0
    %1039 = vmatpush2.msra.mxu0 0.0
    %1040 = vmatprep.subr.mxu0 0.0
    %1041 = vmatpush2.msra.mxu0 0.0
    %1042 = vmatprep.subr.mxu0 0.0
    %1043 = vmatpush2.msra.mxu0 0.0
    %1044 = vmatprep.subr.mxu0 0.0
    %1045 = vmatpush2.msra.mxu0 0.0
    %1046 = vmatprep.subr.mxu0 0.0
    %1047 = vmatpush2.msra.mxu0 0.0
    %1048 = vmatprep.subr.mxu0 0.0
    %1049 = vmatpush2.msra.mxu0 0.0
    %1050 = vmatprep.subr.mxu0 0.0
    %1051 = vmatpush2.msra.mxu0 0.0
    %1052 = vmatprep.subr.mxu0 0.0
    %1053 = vmatpush2.msra.mxu0 0.0
    %1054 = vmatprep.subr.mxu0 0.0
    %1055 = vmatpush2.msra.mxu0 0.0
    %1056 = vmatprep.subr.mxu0 0.0
    %1057 = vmatpush2.msra.mxu0 0.0
    %1058 = vmatprep.mubr.f32.mxu0 0.0
    %v1059 = vand.u32 %v643, 4294901760
    %1060 = vmatmul.mubr.f32.gmra.mxu0 %v1059
    %v1061 = vpop.f32.mrf.mxu0
    %v1062 = vadd.f32 %v977, %v1061
    %v1063 = vpop.f32.mrf.mxu0
    %1064 = vmatprep.mubr.f32.mxu0 0.0
    %v1065 = vand.u32 %v646, 4294901760
    %1066 = vmatmul.mubr.f32.gmra.mxu0 %v1065
    %v1067 = vpop.f32.mrf.mxu0
    %v1068 = vadd.f32 %v985, %v1067
    %v1069 = vpop.f32.mrf.mxu0
    %1070 = vdwg.mxu0
    %1071 = vmatprep.subr.mxu0 0.0
    %1072 = vmatpush1.msra.mxu0 0.0
    %1073 = vmatprep.subr.mxu0 0.0
    %1074 = vmatpush1.msra.mxu0 0.0
    %1075 = vmatprep.subr.mxu0 0.0
    %1076 = vmatpush1.msra.mxu0 0.0
    %1077 = vmatprep.subr.mxu0 0.0
    %1078 = vmatpush1.msra.mxu0 0.0
    %1079 = vmatprep.subr.mxu0 0.0
    %1080 = vmatpush1.msra.mxu0 0.0
    %1081 = vmatprep.subr.mxu0 0.0
    %1082 = vmatpush1.msra.mxu0 0.0
    %1083 = vmatprep.subr.mxu0 0.0
    %1084 = vmatpush1.msra.mxu0 0.0
    %1085 = vmatprep.subr.mxu0 0.0
    %1086 = vmatpush1.msra.mxu0 0.0
    %1087 = vmatprep.subr.mxu0 0.0
    %1088 = vmatpush1.msra.mxu0 0.0
    %1089 = vmatprep.subr.mxu0 0.0
    %1090 = vmatpush1.msra.mxu0 0.0
    %1091 = vmatprep.subr.mxu0 0.0
    %1092 = vmatpush1.msra.mxu0 0.0
    %1093 = vmatprep.subr.mxu0 0.0
    %1094 = vmatpush1.msra.mxu0 0.0
    %1095 = vmatprep.subr.mxu0 0.0
    %1096 = vmatpush1.msra.mxu0 0.0
    %1097 = vmatprep.subr.mxu0 0.0
    %1098 = vmatpush1.msra.mxu0 0.0
    %1099 = vmatprep.subr.mxu0 0.0
    %v1100 = vand.u32 %v638, 4294901760
    %1101 = vmatpush1.msra.mxu0 %v1100
    %1102 = vmatprep.subr.mxu0 0.0
    %v1103 = vand.u32 %v637, 4294901760
    %1104 = vmatpush1.msra.mxu0 %v1103
    %1105 = vmatprep.subr.mxu0 0.0
    %1106 = vmatpush2.msra.mxu0 0.0
    %1107 = vmatprep.subr.mxu0 0.0
    %1108 = vmatpush2.msra.mxu0 0.0
    %1109 = vmatprep.subr.mxu0 0.0
    %1110 = vmatpush2.msra.mxu0 0.0
    %1111 = vmatprep.subr.mxu0 0.0
    %1112 = vmatpush2.msra.mxu0 0.0
    %1113 = vmatprep.subr.mxu0 0.0
    %1114 = vmatpush2.msra.mxu0 0.0
    %1115 = vmatprep.subr.mxu0 0.0
    %1116 = vmatpush2.msra.mxu0 0.0
    %1117 = vmatprep.subr.mxu0 0.0
    %1118 = vmatpush2.msra.mxu0 0.0
    %1119 = vmatprep.subr.mxu0 0.0
    %1120 = vmatpush2.msra.mxu0 0.0
    %1121 = vmatprep.subr.mxu0 0.0
    %1122 = vmatpush2.msra.mxu0 0.0
    %1123 = vmatprep.subr.mxu0 0.0
    %1124 = vmatpush2.msra.mxu0 0.0
    %1125 = vmatprep.subr.mxu0 0.0
    %1126 = vmatpush2.msra.mxu0 0.0
    %1127 = vmatprep.subr.mxu0 0.0
    %1128 = vmatpush2.msra.mxu0 0.0
    %1129 = vmatprep.subr.mxu0 0.0
    %1130 = vmatpush2.msra.mxu0 0.0
    %1131 = vmatprep.subr.mxu0 0.0
    %1132 = vmatpush2.msra.mxu0 0.0
    %1133 = vmatprep.subr.mxu0 0.0
    %1134 = vmatpush2.msra.mxu0 0.0
    %1135 = vmatprep.subr.mxu0 0.0
    %1136 = vmatpush2.msra.mxu0 0.0
    %1137 = vmatprep.mubr.f32.mxu0 0.0
    %v1138 = vand.u32 %v643, 4294901760
    %1139 = vmatmul.mubr.f32.gmra.mxu0 %v1138
    %v1140 = vpop.f32.mrf.mxu0
    %v1141 = vadd.f32 %v1062, %v1140
    %v1142 = vpop.f32.mrf.mxu0
    %1143 = vmatprep.mubr.f32.mxu0 0.0
    %v1144 = vand.u32 %v646, 4294901760
    %1145 = vmatmul.mubr.f32.gmra.mxu0 %v1144
    %v1146 = vpop.f32.mrf.mxu0
    %v1147 = vadd.f32 %v1068, %v1146
    %v1148 = vpop.f32.mrf.mxu0
    %1149 = vdwg.mxu0
    %v1150 = vadd.f32 %v627, %v1141
    %v1151 = vadd.f32 %v628, %v1147
    %1152 = vset.pattern.permute.xlu0 32
    %1153 = vperm.xlu0 %1152, %v608
    %v1154 = vpop.permute.xlu0 %1153
    %1156 = vset.pattern.permute.xlu0 32
    %1157 = vperm.xlu0 %1156, %v614
    %v1158 = vpop.permute.xlu0 %1157
    %v1160 = vmul.f32 %v1154, %v608
    %v1161 = vmul.f32 %v1158, %v614
    %s1162 = scalar_lea.vmem [#allocation5], 16
    %v1163 = vld [vmem:[%s1162] sm:$0xff]
    %v1164 = vld [vmem:[%s1162 + $0x8] sm:$0xff]
    %v1166 = vsel %vm641, %v1163, 0
    %v1169 = vsel %vm641, %v1164, 0
    %1171 = vmatprep.subr.mxu0 0.0
    %1172 = vmatpush1.msra.mxu0 0.0
    %1173 = vmatprep.subr.mxu0 0.0
    %1174 = vmatpush1.msra.mxu0 0.0
    %1175 = vmatprep.subr.mxu0 0.0
    %1176 = vmatpush1.msra.mxu0 0.0
    %1177 = vmatprep.subr.mxu0 0.0
    %1178 = vmatpush1.msra.mxu0 0.0
    %1179 = vmatprep.subr.mxu0 0.0
    %1180 = vmatpush1.msra.mxu0 0.0
    %1181 = vmatprep.subr.mxu0 0.0
    %1182 = vmatpush1.msra.mxu0 0.0
    %1183 = vmatprep.subr.mxu0 0.0
    %1184 = vmatpush1.msra.mxu0 0.0
    %1185 = vmatprep.subr.mxu0 0.0
    %1186 = vmatpush1.msra.mxu0 0.0
    %1187 = vmatprep.subr.mxu0 0.0
    %1188 = vmatpush1.msra.mxu0 0.0
    %1189 = vmatprep.subr.mxu0 0.0
    %1190 = vmatpush1.msra.mxu0 0.0
    %1191 = vmatprep.subr.mxu0 0.0
    %1192 = vmatpush1.msra.mxu0 0.0
    %1193 = vmatprep.subr.mxu0 0.0
    %1194 = vmatpush1.msra.mxu0 0.0
    %1195 = vmatprep.subr.mxu0 0.0
    %1196 = vmatpush1.msra.mxu0 0.0
    %1197 = vmatprep.subr.mxu0 0.0
    %1198 = vmatpush1.msra.mxu0 0.0
    %1199 = vmatprep.subr.mxu0 0.0
    %v1200 = vand.u32 %v1161, 4294901760
    %1201 = vmatpush1.msra.mxu0 %v1200
    %1202 = vmatprep.subr.mxu0 0.0
    %v1203 = vand.u32 %v1160, 4294901760
    %1204 = vmatpush1.msra.mxu0 %v1203
    %1205 = vmatprep.subr.mxu0 0.0
    %1206 = vmatpush2.msra.mxu0 0.0
    %1207 = vmatprep.subr.mxu0 0.0
    %1208 = vmatpush2.msra.mxu0 0.0
    %1209 = vmatprep.subr.mxu0 0.0
    %1210 = vmatpush2.msra.mxu0 0.0
    %1211 = vmatprep.subr.mxu0 0.0
    %1212 = vmatpush2.msra.mxu0 0.0
    %1213 = vmatprep.subr.mxu0 0.0
    %1214 = vmatpush2.msra.mxu0 0.0
    %1215 = vmatprep.subr.mxu0 0.0
    %1216 = vmatpush2.msra.mxu0 0.0
    %1217 = vmatprep.subr.mxu0 0.0
    %1218 = vmatpush2.msra.mxu0 0.0
    %1219 = vmatprep.subr.mxu0 0.0
    %1220 = vmatpush2.msra.mxu0 0.0
    %1221 = vmatprep.subr.mxu0 0.0
    %1222 = vmatpush2.msra.mxu0 0.0
    %1223 = vmatprep.subr.mxu0 0.0
    %1224 = vmatpush2.msra.mxu0 0.0
    %1225 = vmatprep.subr.mxu0 0.0
    %1226 = vmatpush2.msra.mxu0 0.0
    %1227 = vmatprep.subr.mxu0 0.0
    %1228 = vmatpush2.msra.mxu0 0.0
    %1229 = vmatprep.subr.mxu0 0.0
    %1230 = vmatpush2.msra.mxu0 0.0
    %1231 = vmatprep.subr.mxu0 0.0
    %1232 = vmatpush2.msra.mxu0 0.0
    %1233 = vmatprep.subr.mxu0 0.0
    %1234 = vmatpush2.msra.mxu0 0.0
    %1235 = vmatprep.subr.mxu0 0.0
    %1236 = vmatpush2.msra.mxu0 0.0
    %1237 = vmatprep.mubr.f32.mxu0 0.0
    %v1238 = vand.u32 %v1166, 4294901760
    %v1239 = vsub.f32 %v1166, %v1238
    %v1240 = vand.u32 %v1239, 4294901760
    %v1241 = vsub.f32 %v1239, %v1240
    %v1242 = vand.u32 %v1241, 4294901760
    %1243 = vmatmul.mubr.f32.gmra.mxu0 %v1242
    %v1244 = vpop.f32.mrf.mxu0
    %v1245 = vadd.f32 0.0, %v1244
    %v1246 = vpop.f32.mrf.mxu0
    %1247 = vmatprep.mubr.f32.mxu0 0.0
    %v1248 = vand.u32 %v1169, 4294901760
    %v1249 = vsub.f32 %v1169, %v1248
    %v1250 = vand.u32 %v1249, 4294901760
    %v1251 = vsub.f32 %v1249, %v1250
    %v1252 = vand.u32 %v1251, 4294901760
    %1253 = vmatmul.mubr.f32.gmra.mxu0 %v1252
    %v1254 = vpop.f32.mrf.mxu0
    %v1255 = vadd.f32 0.0, %v1254
    %v1256 = vpop.f32.mrf.mxu0
    %1257 = vdwg.mxu0
    %1258 = vmatprep.subr.mxu0 0.0
    %1259 = vmatpush1.msra.mxu0 0.0
    %1260 = vmatprep.subr.mxu0 0.0
    %1261 = vmatpush1.msra.mxu0 0.0
    %1262 = vmatprep.subr.mxu0 0.0
    %1263 = vmatpush1.msra.mxu0 0.0
    %1264 = vmatprep.subr.mxu0 0.0
    %1265 = vmatpush1.msra.mxu0 0.0
    %1266 = vmatprep.subr.mxu0 0.0
    %1267 = vmatpush1.msra.mxu0 0.0
    %1268 = vmatprep.subr.mxu0 0.0
    %1269 = vmatpush1.msra.mxu0 0.0
    %1270 = vmatprep.subr.mxu0 0.0
    %1271 = vmatpush1.msra.mxu0 0.0
    %1272 = vmatprep.subr.mxu0 0.0
    %1273 = vmatpush1.msra.mxu0 0.0
    %1274 = vmatprep.subr.mxu0 0.0
    %1275 = vmatpush1.msra.mxu0 0.0
    %1276 = vmatprep.subr.mxu0 0.0
    %1277 = vmatpush1.msra.mxu0 0.0
    %1278 = vmatprep.subr.mxu0 0.0
    %1279 = vmatpush1.msra.mxu0 0.0
    %1280 = vmatprep.subr.mxu0 0.0
    %1281 = vmatpush1.msra.mxu0 0.0
    %1282 = vmatprep.subr.mxu0 0.0
    %1283 = vmatpush1.msra.mxu0 0.0
    %1284 = vmatprep.subr.mxu0 0.0
    %1285 = vmatpush1.msra.mxu0 0.0
    %1286 = vmatprep.subr.mxu0 0.0
    %v1287 = vand.u32 %v1161, 4294901760
    %v1288 = vsub.f32 %v1161, %v1287
    %v1289 = vand.u32 %v1288, 4294901760
    %v1290 = vsub.f32 %v1288, %v1289
    %v1291 = vand.u32 %v1290, 4294901760
    %1292 = vmatpush1.msra.mxu0 %v1291
    %1293 = vmatprep.subr.mxu0 0.0
    %v1294 = vand.u32 %v1160, 4294901760
    %v1295 = vsub.f32 %v1160, %v1294
    %v1296 = vand.u32 %v1295, 4294901760
    %v1297 = vsub.f32 %v1295, %v1296
    %v1298 = vand.u32 %v1297, 4294901760
    %1299 = vmatpush1.msra.mxu0 %v1298
    %1300 = vmatprep.subr.mxu0 0.0
    %1301 = vmatpush2.msra.mxu0 0.0
    %1302 = vmatprep.subr.mxu0 0.0
    %1303 = vmatpush2.msra.mxu0 0.0
    %1304 = vmatprep.subr.mxu0 0.0
    %1305 = vmatpush2.msra.mxu0 0.0
    %1306 = vmatprep.subr.mxu0 0.0
    %1307 = vmatpush2.msra.mxu0 0.0
    %1308 = vmatprep.subr.mxu0 0.0
    %1309 = vmatpush2.msra.mxu0 0.0
    %1310 = vmatprep.subr.mxu0 0.0
    %1311 = vmatpush2.msra.mxu0 0.0
    %1312 = vmatprep.subr.mxu0 0.0
    %1313 = vmatpush2.msra.mxu0 0.0
    %1314 = vmatprep.subr.mxu0 0.0
    %1315 = vmatpush2.msra.mxu0 0.0
    %1316 = vmatprep.subr.mxu0 0.0
    %1317 = vmatpush2.msra.mxu0 0.0
    %1318 = vmatprep.subr.mxu0 0.0
    %1319 = vmatpush2.msra.mxu0 0.0
    %1320 = vmatprep.subr.mxu0 0.0
    %1321 = vmatpush2.msra.mxu0 0.0
    %1322 = vmatprep.subr.mxu0 0.0
    %1323 = vmatpush2.msra.mxu0 0.0
    %1324 = vmatprep.subr.mxu0 0.0
    %1325 = vmatpush2.msra.mxu0 0.0
    %1326 = vmatprep.subr.mxu0 0.0
    %1327 = vmatpush2.msra.mxu0 0.0
    %1328 = vmatprep.subr.mxu0 0.0
    %1329 = vmatpush2.msra.mxu0 0.0
    %1330 = vmatprep.subr.mxu0 0.0
    %1331 = vmatpush2.msra.mxu0 0.0
    %1332 = vmatprep.mubr.f32.mxu0 0.0
    %v1333 = vand.u32 %v1166, 4294901760
    %1334 = vmatmul.mubr.f32.gmra.mxu0 %v1333
    %v1335 = vpop.f32.mrf.mxu0
    %v1336 = vadd.f32 %v1245, %v1335
    %v1337 = vpop.f32.mrf.mxu0
    %1338 = vmatprep.mubr.f32.mxu0 0.0
    %v1339 = vand.u32 %v1169, 4294901760
    %1340 = vmatmul.mubr.f32.gmra.mxu0 %v1339
    %v1341 = vpop.f32.mrf.mxu0
    %v1342 = vadd.f32 %v1255, %v1341
    %v1343 = vpop.f32.mrf.mxu0
    %1344 = vdwg.mxu0
    %1345 = vmatprep.subr.mxu0 0.0
    %1346 = vmatpush1.msra.mxu0 0.0
    %1347 = vmatprep.subr.mxu0 0.0
    %1348 = vmatpush1.msra.mxu0 0.0
    %1349 = vmatprep.subr.mxu0 0.0
    %1350 = vmatpush1.msra.mxu0 0.0
    %1351 = vmatprep.subr.mxu0 0.0
    %1352 = vmatpush1.msra.mxu0 0.0
    %1353 = vmatprep.subr.mxu0 0.0
    %1354 = vmatpush1.msra.mxu0 0.0
    %1355 = vmatprep.subr.mxu0 0.0
    %1356 = vmatpush1.msra.mxu0 0.0
    %1357 = vmatprep.subr.mxu0 0.0
    %1358 = vmatpush1.msra.mxu0 0.0
    %1359 = vmatprep.subr.mxu0 0.0
    %1360 = vmatpush1.msra.mxu0 0.0
    %1361 = vmatprep.subr.mxu0 0.0
    %1362 = vmatpush1.msra.mxu0 0.0
    %1363 = vmatprep.subr.mxu0 0.0
    %1364 = vmatpush1.msra.mxu0 0.0
    %1365 = vmatprep.subr.mxu0 0.0
    %1366 = vmatpush1.msra.mxu0 0.0
    %1367 = vmatprep.subr.mxu0 0.0
    %1368 = vmatpush1.msra.mxu0 0.0
    %1369 = vmatprep.subr.mxu0 0.0
    %1370 = vmatpush1.msra.mxu0 0.0
    %1371 = vmatprep.subr.mxu0 0.0
    %1372 = vmatpush1.msra.mxu0 0.0
    %1373 = vmatprep.subr.mxu0 0.0
    %v1374 = vand.u32 %v1161, 4294901760
    %v1375 = vsub.f32 %v1161, %v1374
    %1376 = vmatpush1.msra.mxu0 %v1375
    %1377 = vmatprep.subr.mxu0 0.0
    %v1378 = vand.u32 %v1160, 4294901760
    %v1379 = vsub.f32 %v1160, %v1378
    %1380 = vmatpush1.msra.mxu0 %v1379
    %1381 = vmatprep.subr.mxu0 0.0
    %1382 = vmatpush2.msra.mxu0 0.0
    %1383 = vmatprep.subr.mxu0 0.0
    %1384 = vmatpush2.msra.mxu0 0.0
    %1385 = vmatprep.subr.mxu0 0.0
    %1386 = vmatpush2.msra.mxu0 0.0
    %1387 = vmatprep.subr.mxu0 0.0
    %1388 = vmatpush2.msra.mxu0 0.0
    %1389 = vmatprep.subr.mxu0 0.0
    %1390 = vmatpush2.msra.mxu0 0.0
    %1391 = vmatprep.subr.mxu0 0.0
    %1392 = vmatpush2.msra.mxu0 0.0
    %1393 = vmatprep.subr.mxu0 0.0
    %1394 = vmatpush2.msra.mxu0 0.0
    %1395 = vmatprep.subr.mxu0 0.0
    %1396 = vmatpush2.msra.mxu0 0.0
    %1397 = vmatprep.subr.mxu0 0.0
    %1398 = vmatpush2.msra.mxu0 0.0
    %1399 = vmatprep.subr.mxu0 0.0
    %1400 = vmatpush2.msra.mxu0 0.0
    %1401 = vmatprep.subr.mxu0 0.0
    %1402 = vmatpush2.msra.mxu0 0.0
    %1403 = vmatprep.subr.mxu0 0.0
    %1404 = vmatpush2.msra.mxu0 0.0
    %1405 = vmatprep.subr.mxu0 0.0
    %1406 = vmatpush2.msra.mxu0 0.0
    %1407 = vmatprep.subr.mxu0 0.0
    %1408 = vmatpush2.msra.mxu0 0.0
    %1409 = vmatprep.subr.mxu0 0.0
    %1410 = vmatpush2.msra.mxu0 0.0
    %1411 = vmatprep.subr.mxu0 0.0
    %1412 = vmatpush2.msra.mxu0 0.0
    %1413 = vmatprep.mubr.f32.mxu0 0.0
    %v1414 = vand.u32 %v1166, 4294901760
    %v1415 = vsub.f32 %v1166, %v1414
    %1416 = vmatmul.mubr.f32.gmra.mxu0 %v1415
    %v1417 = vpop.f32.mrf.mxu0
    %v1418 = vadd.f32 %v1336, %v1417
    %v1419 = vpop.f32.mrf.mxu0
    %1420 = vmatprep.mubr.f32.mxu0 0.0
    %v1421 = vand.u32 %v1169, 4294901760
    %v1422 = vsub.f32 %v1169, %v1421
    %1423 = vmatmul.mubr.f32.gmra.mxu0 %v1422
    %v1424 = vpop.f32.mrf.mxu0
    %v1425 = vadd.f32 %v1342, %v1424
    %v1426 = vpop.f32.mrf.mxu0
    %1427 = vdwg.mxu0
    %1428 = vmatprep.subr.mxu0 0.0
    %1429 = vmatpush1.msra.mxu0 0.0
    %1430 = vmatprep.subr.mxu0 0.0
    %1431 = vmatpush1.msra.mxu0 0.0
    %1432 = vmatprep.subr.mxu0 0.0
    %1433 = vmatpush1.msra.mxu0 0.0
    %1434 = vmatprep.subr.mxu0 0.0
    %1435 = vmatpush1.msra.mxu0 0.0
    %1436 = vmatprep.subr.mxu0 0.0
    %1437 = vmatpush1.msra.mxu0 0.0
    %1438 = vmatprep.subr.mxu0 0.0
    %1439 = vmatpush1.msra.mxu0 0.0
    %1440 = vmatprep.subr.mxu0 0.0
    %1441 = vmatpush1.msra.mxu0 0.0
    %1442 = vmatprep.subr.mxu0 0.0
    %1443 = vmatpush1.msra.mxu0 0.0
    %1444 = vmatprep.subr.mxu0 0.0
    %1445 = vmatpush1.msra.mxu0 0.0
    %1446 = vmatprep.subr.mxu0 0.0
    %1447 = vmatpush1.msra.mxu0 0.0
    %1448 = vmatprep.subr.mxu0 0.0
    %1449 = vmatpush1.msra.mxu0 0.0
    %1450 = vmatprep.subr.mxu0 0.0
    %1451 = vmatpush1.msra.mxu0 0.0
    %1452 = vmatprep.subr.mxu0 0.0
    %1453 = vmatpush1.msra.mxu0 0.0
    %1454 = vmatprep.subr.mxu0 0.0
    %1455 = vmatpush1.msra.mxu0 0.0
    %1456 = vmatprep.subr.mxu0 0.0
    %v1457 = vand.u32 %v1161, 4294901760
    %1458 = vmatpush1.msra.mxu0 %v1457
    %1459 = vmatprep.subr.mxu0 0.0
    %v1460 = vand.u32 %v1160, 4294901760
    %1461 = vmatpush1.msra.mxu0 %v1460
    %1462 = vmatprep.subr.mxu0 0.0
    %1463 = vmatpush2.msra.mxu0 0.0
    %1464 = vmatprep.subr.mxu0 0.0
    %1465 = vmatpush2.msra.mxu0 0.0
    %1466 = vmatprep.subr.mxu0 0.0
    %1467 = vmatpush2.msra.mxu0 0.0
    %1468 = vmatprep.subr.mxu0 0.0
    %1469 = vmatpush2.msra.mxu0 0.0
    %1470 = vmatprep.subr.mxu0 0.0
    %1471 = vmatpush2.msra.mxu0 0.0
    %1472 = vmatprep.subr.mxu0 0.0
    %1473 = vmatpush2.msra.mxu0 0.0
    %1474 = vmatprep.subr.mxu0 0.0
    %1475 = vmatpush2.msra.mxu0 0.0
    %1476 = vmatprep.subr.mxu0 0.0
    %1477 = vmatpush2.msra.mxu0 0.0
    %1478 = vmatprep.subr.mxu0 0.0
    %1479 = vmatpush2.msra.mxu0 0.0
    %1480 = vmatprep.subr.mxu0 0.0
    %1481 = vmatpush2.msra.mxu0 0.0
    %1482 = vmatprep.subr.mxu0 0.0
    %1483 = vmatpush2.msra.mxu0 0.0
    %1484 = vmatprep.subr.mxu0 0.0
    %1485 = vmatpush2.msra.mxu0 0.0
    %1486 = vmatprep.subr.mxu0 0.0
    %1487 = vmatpush2.msra.mxu0 0.0
    %1488 = vmatprep.subr.mxu0 0.0
    %1489 = vmatpush2.msra.mxu0 0.0
    %1490 = vmatprep.subr.mxu0 0.0
    %1491 = vmatpush2.msra.mxu0 0.0
    %1492 = vmatprep.subr.mxu0 0.0
    %1493 = vmatpush2.msra.mxu0 0.0
    %1494 = vmatprep.mubr.f32.mxu0 0.0
    %v1495 = vand.u32 %v1166, 4294901760
    %v1496 = vsub.f32 %v1166, %v1495
    %v1497 = vand.u32 %v1496, 4294901760
    %1498 = vmatmul.mubr.f32.gmra.mxu0 %v1497
    %v1499 = vpop.f32.mrf.mxu0
    %v1500 = vadd.f32 %v1418, %v1499
    %v1501 = vpop.f32.mrf.mxu0
    %1502 = vmatprep.mubr.f32.mxu0 0.0
    %v1503 = vand.u32 %v1169, 4294901760
    %v1504 = vsub.f32 %v1169, %v1503
    %v1505 = vand.u32 %v1504, 4294901760
    %1506 = vmatmul.mubr.f32.gmra.mxu0 %v1505
    %v1507 = vpop.f32.mrf.mxu0
    %v1508 = vadd.f32 %v1425, %v1507
    %v1509 = vpop.f32.mrf.mxu0
    %1510 = vdwg.mxu0
    %1511 = vmatprep.subr.mxu0 0.0
    %1512 = vmatpush1.msra.mxu0 0.0
    %1513 = vmatprep.subr.mxu0 0.0
    %1514 = vmatpush1.msra.mxu0 0.0
    %1515 = vmatprep.subr.mxu0 0.0
    %1516 = vmatpush1.msra.mxu0 0.0
    %1517 = vmatprep.subr.mxu0 0.0
    %1518 = vmatpush1.msra.mxu0 0.0
    %1519 = vmatprep.subr.mxu0 0.0
    %1520 = vmatpush1.msra.mxu0 0.0
    %1521 = vmatprep.subr.mxu0 0.0
    %1522 = vmatpush1.msra.mxu0 0.0
    %1523 = vmatprep.subr.mxu0 0.0
    %1524 = vmatpush1.msra.mxu0 0.0
    %1525 = vmatprep.subr.mxu0 0.0
    %1526 = vmatpush1.msra.mxu0 0.0
    %1527 = vmatprep.subr.mxu0 0.0
    %1528 = vmatpush1.msra.mxu0 0.0
    %1529 = vmatprep.subr.mxu0 0.0
    %1530 = vmatpush1.msra.mxu0 0.0
    %1531 = vmatprep.subr.mxu0 0.0
    %1532 = vmatpush1.msra.mxu0 0.0
    %1533 = vmatprep.subr.mxu0 0.0
    %1534 = vmatpush1.msra.mxu0 0.0
    %1535 = vmatprep.subr.mxu0 0.0
    %1536 = vmatpush1.msra.mxu0 0.0
    %1537 = vmatprep.subr.mxu0 0.0
    %1538 = vmatpush1.msra.mxu0 0.0
    %1539 = vmatprep.subr.mxu0 0.0
    %v1540 = vand.u32 %v1161, 4294901760
    %v1541 = vsub.f32 %v1161, %v1540
    %v1542 = vand.u32 %v1541, 4294901760
    %1543 = vmatpush1.msra.mxu0 %v1542
    %1544 = vmatprep.subr.mxu0 0.0
    %v1545 = vand.u32 %v1160, 4294901760
    %v1546 = vsub.f32 %v1160, %v1545
    %v1547 = vand.u32 %v1546, 4294901760
    %1548 = vmatpush1.msra.mxu0 %v1547
    %1549 = vmatprep.subr.mxu0 0.0
    %1550 = vmatpush2.msra.mxu0 0.0
    %1551 = vmatprep.subr.mxu0 0.0
    %1552 = vmatpush2.msra.mxu0 0.0
    %1553 = vmatprep.subr.mxu0 0.0
    %1554 = vmatpush2.msra.mxu0 0.0
    %1555 = vmatprep.subr.mxu0 0.0
    %1556 = vmatpush2.msra.mxu0 0.0
    %1557 = vmatprep.subr.mxu0 0.0
    %1558 = vmatpush2.msra.mxu0 0.0
    %1559 = vmatprep.subr.mxu0 0.0
    %1560 = vmatpush2.msra.mxu0 0.0
    %1561 = vmatprep.subr.mxu0 0.0
    %1562 = vmatpush2.msra.mxu0 0.0
    %1563 = vmatprep.subr.mxu0 0.0
    %1564 = vmatpush2.msra.mxu0 0.0
    %1565 = vmatprep.subr.mxu0 0.0
    %1566 = vmatpush2.msra.mxu0 0.0
    %1567 = vmatprep.subr.mxu0 0.0
    %1568 = vmatpush2.msra.mxu0 0.0
    %1569 = vmatprep.subr.mxu0 0.0
    %1570 = vmatpush2.msra.mxu0 0.0
    %1571 = vmatprep.subr.mxu0 0.0
    %1572 = vmatpush2.msra.mxu0 0.0
    %1573 = vmatprep.subr.mxu0 0.0
    %1574 = vmatpush2.msra.mxu0 0.0
    %1575 = vmatprep.subr.mxu0 0.0
    %1576 = vmatpush2.msra.mxu0 0.0
    %1577 = vmatprep.subr.mxu0 0.0
    %1578 = vmatpush2.msra.mxu0 0.0
    %1579 = vmatprep.subr.mxu0 0.0
    %1580 = vmatpush2.msra.mxu0 0.0
    %1581 = vmatprep.mubr.f32.mxu0 0.0
    %v1582 = vand.u32 %v1166, 4294901760
    %1583 = vmatmul.mubr.f32.gmra.mxu0 %v1582
    %v1584 = vpop.f32.mrf.mxu0
    %v1585 = vadd.f32 %v1500, %v1584
    %v1586 = vpop.f32.mrf.mxu0
    %1587 = vmatprep.mubr.f32.mxu0 0.0
    %v1588 = vand.u32 %v1169, 4294901760
    %1589 = vmatmul.mubr.f32.gmra.mxu0 %v1588
    %v1590 = vpop.f32.mrf.mxu0
    %v1591 = vadd.f32 %v1508, %v1590
    %v1592 = vpop.f32.mrf.mxu0
    %1593 = vdwg.mxu0
    %1594 = vmatprep.subr.mxu0 0.0
    %1595 = vmatpush1.msra.mxu0 0.0
    %1596 = vmatprep.subr.mxu0 0.0
    %1597 = vmatpush1.msra.mxu0 0.0
    %1598 = vmatprep.subr.mxu0 0.0
    %1599 = vmatpush1.msra.mxu0 0.0
    %1600 = vmatprep.subr.mxu0 0.0
    %1601 = vmatpush1.msra.mxu0 0.0
    %1602 = vmatprep.subr.mxu0 0.0
    %1603 = vmatpush1.msra.mxu0 0.0
    %1604 = vmatprep.subr.mxu0 0.0
    %1605 = vmatpush1.msra.mxu0 0.0
    %1606 = vmatprep.subr.mxu0 0.0
    %1607 = vmatpush1.msra.mxu0 0.0
    %1608 = vmatprep.subr.mxu0 0.0
    %1609 = vmatpush1.msra.mxu0 0.0
    %1610 = vmatprep.subr.mxu0 0.0
    %1611 = vmatpush1.msra.mxu0 0.0
    %1612 = vmatprep.subr.mxu0 0.0
    %1613 = vmatpush1.msra.mxu0 0.0
    %1614 = vmatprep.subr.mxu0 0.0
    %1615 = vmatpush1.msra.mxu0 0.0
    %1616 = vmatprep.subr.mxu0 0.0
    %1617 = vmatpush1.msra.mxu0 0.0
    %1618 = vmatprep.subr.mxu0 0.0
    %1619 = vmatpush1.msra.mxu0 0.0
    %1620 = vmatprep.subr.mxu0 0.0
    %1621 = vmatpush1.msra.mxu0 0.0
    %1622 = vmatprep.subr.mxu0 0.0
    %v1623 = vand.u32 %v1161, 4294901760
    %1624 = vmatpush1.msra.mxu0 %v1623
    %1625 = vmatprep.subr.mxu0 0.0
    %v1626 = vand.u32 %v1160, 4294901760
    %1627 = vmatpush1.msra.mxu0 %v1626
    %1628 = vmatprep.subr.mxu0 0.0
    %1629 = vmatpush2.msra.mxu0 0.0
    %1630 = vmatprep.subr.mxu0 0.0
    %1631 = vmatpush2.msra.mxu0 0.0
    %1632 = vmatprep.subr.mxu0 0.0
    %1633 = vmatpush2.msra.mxu0 0.0
    %1634 = vmatprep.subr.mxu0 0.0
    %1635 = vmatpush2.msra.mxu0 0.0
    %1636 = vmatprep.subr.mxu0 0.0
    %1637 = vmatpush2.msra.mxu0 0.0
    %1638 = vmatprep.subr.mxu0 0.0
    %1639 = vmatpush2.msra.mxu0 0.0
    %1640 = vmatprep.subr.mxu0 0.0
    %1641 = vmatpush2.msra.mxu0 0.0
    %1642 = vmatprep.subr.mxu0 0.0
    %1643 = vmatpush2.msra.mxu0 0.0
    %1644 = vmatprep.subr.mxu0 0.0
    %1645 = vmatpush2.msra.mxu0 0.0
    %1646 = vmatprep.subr.mxu0 0.0
    %1647 = vmatpush2.msra.mxu0 0.0
    %1648 = vmatprep.subr.mxu0 0.0
    %1649 = vmatpush2.msra.mxu0 0.0
    %1650 = vmatprep.subr.mxu0 0.0
    %1651 = vmatpush2.msra.mxu0 0.0
    %1652 = vmatprep.subr.mxu0 0.0
    %1653 = vmatpush2.msra.mxu0 0.0
    %1654 = vmatprep.subr.mxu0 0.0
    %1655 = vmatpush2.msra.mxu0 0.0
    %1656 = vmatprep.subr.mxu0 0.0
    %1657 = vmatpush2.msra.mxu0 0.0
    %1658 = vmatprep.subr.mxu0 0.0
    %1659 = vmatpush2.msra.mxu0 0.0
    %1660 = vmatprep.mubr.f32.mxu0 0.0
    %v1661 = vand.u32 %v1166, 4294901760
    %1662 = vmatmul.mubr.f32.gmra.mxu0 %v1661
    %v1663 = vpop.f32.mrf.mxu0
    %v1664 = vadd.f32 %v1585, %v1663
    %v1665 = vpop.f32.mrf.mxu0
    %1666 = vmatprep.mubr.f32.mxu0 0.0
    %v1667 = vand.u32 %v1169, 4294901760
    %1668 = vmatmul.mubr.f32.gmra.mxu0 %v1667
    %v1669 = vpop.f32.mrf.mxu0
    %v1670 = vadd.f32 %v1591, %v1669
    %v1671 = vpop.f32.mrf.mxu0
    %1672 = vdwg.mxu0
    %v1673 = vadd.f32 %v1150, %v1664
    %v1674 = vadd.f32 %v1151, %v1670
    %v1675 = vld [vmem:[#allocation7] sm:$0xff]
    %v1676 = vld [vmem:[#allocation7 + $0x8] sm:$0xff]
    %v1677 = vld [vmem:[#allocation7 + $0x10] sm:$0xff]
    %v1678 = vld [vmem:[#allocation7 + $0x18] sm:$0xff]
    %v1679 = vld [vmem:[%s4] sm:$0x1]
    %v1680 = vlaneseq
    %v1681 = vshrl.u32 %v1680, 7
    %v1682 = vsub.s32 0, %v1681
    %v1683 = vrot.slane %v1679, %v1682
    %v1685 = vsel %vm82, %v1673, 0
    %v1688 = vsel %vm82, %v1674, 0
    %1690 = vmatprep.subr.mxu0 0.0
    %1691 = vmatpush1.msra.mxu0 0.0
    %1692 = vmatprep.subr.mxu0 0.0
    %1693 = vmatpush1.msra.mxu0 0.0
    %1694 = vmatprep.subr.mxu0 0.0
    %1695 = vmatpush1.msra.mxu0 0.0
    %1696 = vmatprep.subr.mxu0 0.0
    %1697 = vmatpush1.msra.mxu0 0.0
    %1698 = vmatprep.subr.mxu0 0.0
    %1699 = vmatpush1.msra.mxu0 0.0
    %1700 = vmatprep.subr.mxu0 0.0
    %1701 = vmatpush1.msra.mxu0 0.0
    %1702 = vmatprep.subr.mxu0 0.0
    %1703 = vmatpush1.msra.mxu0 0.0
    %1704 = vmatprep.subr.mxu0 0.0
    %1705 = vmatpush1.msra.mxu0 0.0
    %1706 = vmatprep.subr.mxu0 0.0
    %1707 = vmatpush1.msra.mxu0 0.0
    %1708 = vmatprep.subr.mxu0 0.0
    %1709 = vmatpush1.msra.mxu0 0.0
    %1710 = vmatprep.subr.mxu0 0.0
    %1711 = vmatpush1.msra.mxu0 0.0
    %1712 = vmatprep.subr.mxu0 0.0
    %1713 = vmatpush1.msra.mxu0 0.0
    %1714 = vmatprep.subr.mxu0 0.0
    %v1715 = vand.u32 %v1678, 4294901760
    %1716 = vmatpush1.msra.mxu0 %v1715
    %1717 = vmatprep.subr.mxu0 0.0
    %v1718 = vand.u32 %v1677, 4294901760
    %1719 = vmatpush1.msra.mxu0 %v1718
    %1720 = vmatprep.subr.mxu0 0.0
    %v1721 = vand.u32 %v1676, 4294901760
    %1722 = vmatpush1.msra.mxu0 %v1721
    %1723 = vmatprep.subr.mxu0 0.0
    %v1724 = vand.u32 %v1675, 4294901760
    %1725 = vmatpush1.msra.mxu0 %v1724
    %1726 = vmatprep.subr.mxu0 0.0
    %1727 = vmatpush2.msra.mxu0 0.0
    %1728 = vmatprep.subr.mxu0 0.0
    %1729 = vmatpush2.msra.mxu0 0.0
    %1730 = vmatprep.subr.mxu0 0.0
    %1731 = vmatpush2.msra.mxu0 0.0
    %1732 = vmatprep.subr.mxu0 0.0
    %1733 = vmatpush2.msra.mxu0 0.0
    %1734 = vmatprep.subr.mxu0 0.0
    %1735 = vmatpush2.msra.mxu0 0.0
    %1736 = vmatprep.subr.mxu0 0.0
    %1737 = vmatpush2.msra.mxu0 0.0
    %1738 = vmatprep.subr.mxu0 0.0
    %1739 = vmatpush2.msra.mxu0 0.0
    %1740 = vmatprep.subr.mxu0 0.0
    %1741 = vmatpush2.msra.mxu0 0.0
    %1742 = vmatprep.subr.mxu0 0.0
    %1743 = vmatpush2.msra.mxu0 0.0
    %1744 = vmatprep.subr.mxu0 0.0
    %1745 = vmatpush2.msra.mxu0 0.0
    %1746 = vmatprep.subr.mxu0 0.0
    %1747 = vmatpush2.msra.mxu0 0.0
    %1748 = vmatprep.subr.mxu0 0.0
    %1749 = vmatpush2.msra.mxu0 0.0
    %1750 = vmatprep.subr.mxu0 0.0
    %1751 = vmatpush2.msra.mxu0 0.0
    %1752 = vmatprep.subr.mxu0 0.0
    %1753 = vmatpush2.msra.mxu0 0.0
    %1754 = vmatprep.subr.mxu0 0.0
    %1755 = vmatpush2.msra.mxu0 0.0
    %1756 = vmatprep.subr.mxu0 0.0
    %1757 = vmatpush2.msra.mxu0 0.0
    %1758 = vmatprep.mubr.f32.mxu0 0.0
    %v1759 = vand.u32 %v1685, 4294901760
    %v1760 = vsub.f32 %v1685, %v1759
    %v1761 = vand.u32 %v1760, 4294901760
    %v1762 = vsub.f32 %v1760, %v1761
    %v1763 = vand.u32 %v1762, 4294901760
    %1764 = vmatmul.mubr.f32.gmra.mxu0 %v1763
    %v1765 = vpop.f32.mrf.mxu0
    %v1766 = vadd.f32 %v1683, %v1765
    %v1767 = vpop.f32.mrf.mxu0
    %1768 = vmatprep.mubr.f32.mxu0 0.0
    %v1769 = vand.u32 %v1688, 4294901760
    %v1770 = vsub.f32 %v1688, %v1769
    %v1771 = vand.u32 %v1770, 4294901760
    %v1772 = vsub.f32 %v1770, %v1771
    %v1773 = vand.u32 %v1772, 4294901760
    %1774 = vmatmul.mubr.f32.gmra.mxu0 %v1773
    %v1775 = vpop.f32.mrf.mxu0
    %v1776 = vadd.f32 %v1683, %v1775
    %v1777 = vpop.f32.mrf.mxu0
    %1778 = vdwg.mxu0
    %1779 = vmatprep.subr.mxu0 0.0
    %1780 = vmatpush1.msra.mxu0 0.0
    %1781 = vmatprep.subr.mxu0 0.0
    %1782 = vmatpush1.msra.mxu0 0.0
    %1783 = vmatprep.subr.mxu0 0.0
    %1784 = vmatpush1.msra.mxu0 0.0
    %1785 = vmatprep.subr.mxu0 0.0
    %1786 = vmatpush1.msra.mxu0 0.0
    %1787 = vmatprep.subr.mxu0 0.0
    %1788 = vmatpush1.msra.mxu0 0.0
    %1789 = vmatprep.subr.mxu0 0.0
    %1790 = vmatpush1.msra.mxu0 0.0
    %1791 = vmatprep.subr.mxu0 0.0
    %1792 = vmatpush1.msra.mxu0 0.0
    %1793 = vmatprep.subr.mxu0 0.0
    %1794 = vmatpush1.msra.mxu0 0.0
    %1795 = vmatprep.subr.mxu0 0.0
    %1796 = vmatpush1.msra.mxu0 0.0
    %1797 = vmatprep.subr.mxu0 0.0
    %1798 = vmatpush1.msra.mxu0 0.0
    %1799 = vmatprep.subr.mxu0 0.0
    %1800 = vmatpush1.msra.mxu0 0.0
    %1801 = vmatprep.subr.mxu0 0.0
    %1802 = vmatpush1.msra.mxu0 0.0
    %1803 = vmatprep.subr.mxu0 0.0
    %v1804 = vand.u32 %v1678, 4294901760
    %v1805 = vsub.f32 %v1678, %v1804
    %v1806 = vand.u32 %v1805, 4294901760
    %v1807 = vsub.f32 %v1805, %v1806
    %v1808 = vand.u32 %v1807, 4294901760
    %1809 = vmatpush1.msra.mxu0 %v1808
    %1810 = vmatprep.subr.mxu0 0.0
    %v1811 = vand.u32 %v1677, 4294901760
    %v1812 = vsub.f32 %v1677, %v1811
    %v1813 = vand.u32 %v1812, 4294901760
    %v1814 = vsub.f32 %v1812, %v1813
    %v1815 = vand.u32 %v1814, 4294901760
    %1816 = vmatpush1.msra.mxu0 %v1815
    %1817 = vmatprep.subr.mxu0 0.0
    %v1818 = vand.u32 %v1676, 4294901760
    %v1819 = vsub.f32 %v1676, %v1818
    %v1820 = vand.u32 %v1819, 4294901760
    %v1821 = vsub.f32 %v1819, %v1820
    %v1822 = vand.u32 %v1821, 4294901760
    %1823 = vmatpush1.msra.mxu0 %v1822
    %1824 = vmatprep.subr.mxu0 0.0
    %v1825 = vand.u32 %v1675, 4294901760
    %v1826 = vsub.f32 %v1675, %v1825
    %v1827 = vand.u32 %v1826, 4294901760
    %v1828 = vsub.f32 %v1826, %v1827
    %v1829 = vand.u32 %v1828, 4294901760
    %1830 = vmatpush1.msra.mxu0 %v1829
    %1831 = vmatprep.subr.mxu0 0.0
    %1832 = vmatpush2.msra.mxu0 0.0
    %1833 = vmatprep.subr.mxu0 0.0
    %1834 = vmatpush2.msra.mxu0 0.0
    %1835 = vmatprep.subr.mxu0 0.0
    %1836 = vmatpush2.msra.mxu0 0.0
    %1837 = vmatprep.subr.mxu0 0.0
    %1838 = vmatpush2.msra.mxu0 0.0
    %1839 = vmatprep.subr.mxu0 0.0
    %1840 = vmatpush2.msra.mxu0 0.0
    %1841 = vmatprep.subr.mxu0 0.0
    %1842 = vmatpush2.msra.mxu0 0.0
    %1843 = vmatprep.subr.mxu0 0.0
    %1844 = vmatpush2.msra.mxu0 0.0
    %1845 = vmatprep.subr.mxu0 0.0
    %1846 = vmatpush2.msra.mxu0 0.0
    %1847 = vmatprep.subr.mxu0 0.0
    %1848 = vmatpush2.msra.mxu0 0.0
    %1849 = vmatprep.subr.mxu0 0.0
    %1850 = vmatpush2.msra.mxu0 0.0
    %1851 = vmatprep.subr.mxu0 0.0
    %1852 = vmatpush2.msra.mxu0 0.0
    %1853 = vmatprep.subr.mxu0 0.0
    %1854 = vmatpush2.msra.mxu0 0.0
    %1855 = vmatprep.subr.mxu0 0.0
    %1856 = vmatpush2.msra.mxu0 0.0
    %1857 = vmatprep.subr.mxu0 0.0
    %1858 = vmatpush2.msra.mxu0 0.0
    %1859 = vmatprep.subr.mxu0 0.0
    %1860 = vmatpush2.msra.mxu0 0.0
    %1861 = vmatprep.subr.mxu0 0.0
    %1862 = vmatpush2.msra.mxu0 0.0
    %1863 = vmatprep.mubr.f32.mxu0 0.0
    %v1864 = vand.u32 %v1685, 4294901760
    %1865 = vmatmul.mubr.f32.gmra.mxu0 %v1864
    %v1866 = vpop.f32.mrf.mxu0
    %v1867 = vadd.f32 %v1766, %v1866
    %v1868 = vpop.f32.mrf.mxu0
    %1869 = vmatprep.mubr.f32.mxu0 0.0
    %v1870 = vand.u32 %v1688, 4294901760
    %1871 = vmatmul.mubr.f32.gmra.mxu0 %v1870
    %v1872 = vpop.f32.mrf.mxu0
    %v1873 = vadd.f32 %v1776, %v1872
    %v1874 = vpop.f32.mrf.mxu0
    %1875 = vdwg.mxu0
    %1876 = vmatprep.subr.mxu0 0.0
    %1877 = vmatpush1.msra.mxu0 0.0
    %1878 = vmatprep.subr.mxu0 0.0
    %1879 = vmatpush1.msra.mxu0 0.0
    %1880 = vmatprep.subr.mxu0 0.0
    %1881 = vmatpush1.msra.mxu0 0.0
    %1882 = vmatprep.subr.mxu0 0.0
    %1883 = vmatpush1.msra.mxu0 0.0
    %1884 = vmatprep.subr.mxu0 0.0
    %1885 = vmatpush1.msra.mxu0 0.0
    %1886 = vmatprep.subr.mxu0 0.0
    %1887 = vmatpush1.msra.mxu0 0.0
    %1888 = vmatprep.subr.mxu0 0.0
    %1889 = vmatpush1.msra.mxu0 0.0
    %1890 = vmatprep.subr.mxu0 0.0
    %1891 = vmatpush1.msra.mxu0 0.0
    %1892 = vmatprep.subr.mxu0 0.0
    %1893 = vmatpush1.msra.mxu0 0.0
    %1894 = vmatprep.subr.mxu0 0.0
    %1895 = vmatpush1.msra.mxu0 0.0
    %1896 = vmatprep.subr.mxu0 0.0
    %1897 = vmatpush1.msra.mxu0 0.0
    %1898 = vmatprep.subr.mxu0 0.0
    %1899 = vmatpush1.msra.mxu0 0.0
    %1900 = vmatprep.subr.mxu0 0.0
    %v1901 = vand.u32 %v1678, 4294901760
    %v1902 = vsub.f32 %v1678, %v1901
    %1903 = vmatpush1.msra.mxu0 %v1902
    %1904 = vmatprep.subr.mxu0 0.0
    %v1905 = vand.u32 %v1677, 4294901760
    %v1906 = vsub.f32 %v1677, %v1905
    %1907 = vmatpush1.msra.mxu0 %v1906
    %1908 = vmatprep.subr.mxu0 0.0
    %v1909 = vand.u32 %v1676, 4294901760
    %v1910 = vsub.f32 %v1676, %v1909
    %1911 = vmatpush1.msra.mxu0 %v1910
    %1912 = vmatprep.subr.mxu0 0.0
    %v1913 = vand.u32 %v1675, 4294901760
    %v1914 = vsub.f32 %v1675, %v1913
    %1915 = vmatpush1.msra.mxu0 %v1914
    %1916 = vmatprep.subr.mxu0 0.0
    %1917 = vmatpush2.msra.mxu0 0.0
    %1918 = vmatprep.subr.mxu0 0.0
    %1919 = vmatpush2.msra.mxu0 0.0
    %1920 = vmatprep.subr.mxu0 0.0
    %1921 = vmatpush2.msra.mxu0 0.0
    %1922 = vmatprep.subr.mxu0 0.0
    %1923 = vmatpush2.msra.mxu0 0.0
    %1924 = vmatprep.subr.mxu0 0.0
    %1925 = vmatpush2.msra.mxu0 0.0
    %1926 = vmatprep.subr.mxu0 0.0
    %1927 = vmatpush2.msra.mxu0 0.0
    %1928 = vmatprep.subr.mxu0 0.0
    %1929 = vmatpush2.msra.mxu0 0.0
    %1930 = vmatprep.subr.mxu0 0.0
    %1931 = vmatpush2.msra.mxu0 0.0
    %1932 = vmatprep.subr.mxu0 0.0
    %1933 = vmatpush2.msra.mxu0 0.0
    %1934 = vmatprep.subr.mxu0 0.0
    %1935 = vmatpush2.msra.mxu0 0.0
    %1936 = vmatprep.subr.mxu0 0.0
    %1937 = vmatpush2.msra.mxu0 0.0
    %1938 = vmatprep.subr.mxu0 0.0
    %1939 = vmatpush2.msra.mxu0 0.0
    %1940 = vmatprep.subr.mxu0 0.0
    %1941 = vmatpush2.msra.mxu0 0.0
    %1942 = vmatprep.subr.mxu0 0.0
    %1943 = vmatpush2.msra.mxu0 0.0
    %1944 = vmatprep.subr.mxu0 0.0
    %1945 = vmatpush2.msra.mxu0 0.0
    %1946 = vmatprep.subr.mxu0 0.0
    %1947 = vmatpush2.msra.mxu0 0.0
    %1948 = vmatprep.mubr.f32.mxu0 0.0
    %v1949 = vand.u32 %v1685, 4294901760
    %v1950 = vsub.f32 %v1685, %v1949
    %1951 = vmatmul.mubr.f32.gmra.mxu0 %v1950
    %v1952 = vpop.f32.mrf.mxu0
    %v1953 = vadd.f32 %v1867, %v1952
    %v1954 = vpop.f32.mrf.mxu0
    %1955 = vmatprep.mubr.f32.mxu0 0.0
    %v1956 = vand.u32 %v1688, 4294901760
    %v1957 = vsub.f32 %v1688, %v1956
    %1958 = vmatmul.mubr.f32.gmra.mxu0 %v1957
    %v1959 = vpop.f32.mrf.mxu0
    %v1960 = vadd.f32 %v1873, %v1959
    %v1961 = vpop.f32.mrf.mxu0
    %1962 = vdwg.mxu0
    %1963 = vmatprep.subr.mxu0 0.0
    %1964 = vmatpush1.msra.mxu0 0.0
    %1965 = vmatprep.subr.mxu0 0.0
    %1966 = vmatpush1.msra.mxu0 0.0
    %1967 = vmatprep.subr.mxu0 0.0
    %1968 = vmatpush1.msra.mxu0 0.0
    %1969 = vmatprep.subr.mxu0 0.0
    %1970 = vmatpush1.msra.mxu0 0.0
    %1971 = vmatprep.subr.mxu0 0.0
    %1972 = vmatpush1.msra.mxu0 0.0
    %1973 = vmatprep.subr.mxu0 0.0
    %1974 = vmatpush1.msra.mxu0 0.0
    %1975 = vmatprep.subr.mxu0 0.0
    %1976 = vmatpush1.msra.mxu0 0.0
    %1977 = vmatprep.subr.mxu0 0.0
    %1978 = vmatpush1.msra.mxu0 0.0
    %1979 = vmatprep.subr.mxu0 0.0
    %1980 = vmatpush1.msra.mxu0 0.0
    %1981 = vmatprep.subr.mxu0 0.0
    %1982 = vmatpush1.msra.mxu0 0.0
    %1983 = vmatprep.subr.mxu0 0.0
    %1984 = vmatpush1.msra.mxu0 0.0
    %1985 = vmatprep.subr.mxu0 0.0
    %1986 = vmatpush1.msra.mxu0 0.0
    %1987 = vmatprep.subr.mxu0 0.0
    %v1988 = vand.u32 %v1678, 4294901760
    %1989 = vmatpush1.msra.mxu0 %v1988
    %1990 = vmatprep.subr.mxu0 0.0
    %v1991 = vand.u32 %v1677, 4294901760
    %1992 = vmatpush1.msra.mxu0 %v1991
    %1993 = vmatprep.subr.mxu0 0.0
    %v1994 = vand.u32 %v1676, 4294901760
    %1995 = vmatpush1.msra.mxu0 %v1994
    %1996 = vmatprep.subr.mxu0 0.0
    %v1997 = vand.u32 %v1675, 4294901760
    %1998 = vmatpush1.msra.mxu0 %v1997
    %1999 = vmatprep.subr.mxu0 0.0
    %2000 = vmatpush2.msra.mxu0 0.0
    %2001 = vmatprep.subr.mxu0 0.0
    %2002 = vmatpush2.msra.mxu0 0.0
    %2003 = vmatprep.subr.mxu0 0.0
    %2004 = vmatpush2.msra.mxu0 0.0
    %2005 = vmatprep.subr.mxu0 0.0
    %2006 = vmatpush2.msra.mxu0 0.0
    %2007 = vmatprep.subr.mxu0 0.0
    %2008 = vmatpush2.msra.mxu0 0.0
    %2009 = vmatprep.subr.mxu0 0.0
    %2010 = vmatpush2.msra.mxu0 0.0
    %2011 = vmatprep.subr.mxu0 0.0
    %2012 = vmatpush2.msra.mxu0 0.0
    %2013 = vmatprep.subr.mxu0 0.0
    %2014 = vmatpush2.msra.mxu0 0.0
    %2015 = vmatprep.subr.mxu0 0.0
    %2016 = vmatpush2.msra.mxu0 0.0
    %2017 = vmatprep.subr.mxu0 0.0
    %2018 = vmatpush2.msra.mxu0 0.0
    %2019 = vmatprep.subr.mxu0 0.0
    %2020 = vmatpush2.msra.mxu0 0.0
    %2021 = vmatprep.subr.mxu0 0.0
    %2022 = vmatpush2.msra.mxu0 0.0
    %2023 = vmatprep.subr.mxu0 0.0
    %2024 = vmatpush2.msra.mxu0 0.0
    %2025 = vmatprep.subr.mxu0 0.0
    %2026 = vmatpush2.msra.mxu0 0.0
    %2027 = vmatprep.subr.mxu0 0.0
    %2028 = vmatpush2.msra.mxu0 0.0
    %2029 = vmatprep.subr.mxu0 0.0
    %2030 = vmatpush2.msra.mxu0 0.0
    %2031 = vmatprep.mubr.f32.mxu0 0.0
    %v2032 = vand.u32 %v1685, 4294901760
    %v2033 = vsub.f32 %v1685, %v2032
    %v2034 = vand.u32 %v2033, 4294901760
    %2035 = vmatmul.mubr.f32.gmra.mxu0 %v2034
    %v2036 = vpop.f32.mrf.mxu0
    %v2037 = vadd.f32 %v1953, %v2036
    %v2038 = vpop.f32.mrf.mxu0
    %2039 = vmatprep.mubr.f32.mxu0 0.0
    %v2040 = vand.u32 %v1688, 4294901760
    %v2041 = vsub.f32 %v1688, %v2040
    %v2042 = vand.u32 %v2041, 4294901760
    %2043 = vmatmul.mubr.f32.gmra.mxu0 %v2042
    %v2044 = vpop.f32.mrf.mxu0
    %v2045 = vadd.f32 %v1960, %v2044
    %v2046 = vpop.f32.mrf.mxu0
    %2047 = vdwg.mxu0
    %2048 = vmatprep.subr.mxu0 0.0
    %2049 = vmatpush1.msra.mxu0 0.0
    %2050 = vmatprep.subr.mxu0 0.0
    %2051 = vmatpush1.msra.mxu0 0.0
    %2052 = vmatprep.subr.mxu0 0.0
    %2053 = vmatpush1.msra.mxu0 0.0
    %2054 = vmatprep.subr.mxu0 0.0
    %2055 = vmatpush1.msra.mxu0 0.0
    %2056 = vmatprep.subr.mxu0 0.0
    %2057 = vmatpush1.msra.mxu0 0.0
    %2058 = vmatprep.subr.mxu0 0.0
    %2059 = vmatpush1.msra.mxu0 0.0
    %2060 = vmatprep.subr.mxu0 0.0
    %2061 = vmatpush1.msra.mxu0 0.0
    %2062 = vmatprep.subr.mxu0 0.0
    %2063 = vmatpush1.msra.mxu0 0.0
    %2064 = vmatprep.subr.mxu0 0.0
    %2065 = vmatpush1.msra.mxu0 0.0
    %2066 = vmatprep.subr.mxu0 0.0
    %2067 = vmatpush1.msra.mxu0 0.0
    %2068 = vmatprep.subr.mxu0 0.0
    %2069 = vmatpush1.msra.mxu0 0.0
    %2070 = vmatprep.subr.mxu0 0.0
    %2071 = vmatpush1.msra.mxu0 0.0
    %2072 = vmatprep.subr.mxu0 0.0
    %v2073 = vand.u32 %v1678, 4294901760
    %v2074 = vsub.f32 %v1678, %v2073
    %v2075 = vand.u32 %v2074, 4294901760
    %2076 = vmatpush1.msra.mxu0 %v2075
    %2077 = vmatprep.subr.mxu0 0.0
    %v2078 = vand.u32 %v1677, 4294901760
    %v2079 = vsub.f32 %v1677, %v2078
    %v2080 = vand.u32 %v2079, 4294901760
    %2081 = vmatpush1.msra.mxu0 %v2080
    %2082 = vmatprep.subr.mxu0 0.0
    %v2083 = vand.u32 %v1676, 4294901760
    %v2084 = vsub.f32 %v1676, %v2083
    %v2085 = vand.u32 %v2084, 4294901760
    %2086 = vmatpush1.msra.mxu0 %v2085
    %2087 = vmatprep.subr.mxu0 0.0
    %v2088 = vand.u32 %v1675, 4294901760
    %v2089 = vsub.f32 %v1675, %v2088
    %v2090 = vand.u32 %v2089, 4294901760
    %2091 = vmatpush1.msra.mxu0 %v2090
    %2092 = vmatprep.subr.mxu0 0.0
    %2093 = vmatpush2.msra.mxu0 0.0
    %2094 = vmatprep.subr.mxu0 0.0
    %2095 = vmatpush2.msra.mxu0 0.0
    %2096 = vmatprep.subr.mxu0 0.0
    %2097 = vmatpush2.msra.mxu0 0.0
    %2098 = vmatprep.subr.mxu0 0.0
    %2099 = vmatpush2.msra.mxu0 0.0
    %2100 = vmatprep.subr.mxu0 0.0
    %2101 = vmatpush2.msra.mxu0 0.0
    %2102 = vmatprep.subr.mxu0 0.0
    %2103 = vmatpush2.msra.mxu0 0.0
    %2104 = vmatprep.subr.mxu0 0.0
    %2105 = vmatpush2.msra.mxu0 0.0
    %2106 = vmatprep.subr.mxu0 0.0
    %2107 = vmatpush2.msra.mxu0 0.0
    %2108 = vmatprep.subr.mxu0 0.0
    %2109 = vmatpush2.msra.mxu0 0.0
    %2110 = vmatprep.subr.mxu0 0.0
    %2111 = vmatpush2.msra.mxu0 0.0
    %2112 = vmatprep.subr.mxu0 0.0
    %2113 = vmatpush2.msra.mxu0 0.0
    %2114 = vmatprep.subr.mxu0 0.0
    %2115 = vmatpush2.msra.mxu0 0.0
    %2116 = vmatprep.subr.mxu0 0.0
    %2117 = vmatpush2.msra.mxu0 0.0
    %2118 = vmatprep.subr.mxu0 0.0
    %2119 = vmatpush2.msra.mxu0 0.0
    %2120 = vmatprep.subr.mxu0 0.0
    %2121 = vmatpush2.msra.mxu0 0.0
    %2122 = vmatprep.subr.mxu0 0.0
    %2123 = vmatpush2.msra.mxu0 0.0
    %2124 = vmatprep.mubr.f32.mxu0 0.0
    %v2125 = vand.u32 %v1685, 4294901760
    %2126 = vmatmul.mubr.f32.gmra.mxu0 %v2125
    %v2127 = vpop.f32.mrf.mxu0
    %v2128 = vadd.f32 %v2037, %v2127
    %v2129 = vpop.f32.mrf.mxu0
    %2130 = vmatprep.mubr.f32.mxu0 0.0
    %v2131 = vand.u32 %v1688, 4294901760
    %2132 = vmatmul.mubr.f32.gmra.mxu0 %v2131
    %v2133 = vpop.f32.mrf.mxu0
    %v2134 = vadd.f32 %v2045, %v2133
    %v2135 = vpop.f32.mrf.mxu0
    %2136 = vdwg.mxu0
    %2137 = vmatprep.subr.mxu0 0.0
    %2138 = vmatpush1.msra.mxu0 0.0
    %2139 = vmatprep.subr.mxu0 0.0
    %2140 = vmatpush1.msra.mxu0 0.0
    %2141 = vmatprep.subr.mxu0 0.0
    %2142 = vmatpush1.msra.mxu0 0.0
    %2143 = vmatprep.subr.mxu0 0.0
    %2144 = vmatpush1.msra.mxu0 0.0
    %2145 = vmatprep.subr.mxu0 0.0
    %2146 = vmatpush1.msra.mxu0 0.0
    %2147 = vmatprep.subr.mxu0 0.0
    %2148 = vmatpush1.msra.mxu0 0.0
    %2149 = vmatprep.subr.mxu0 0.0
    %2150 = vmatpush1.msra.mxu0 0.0
    %2151 = vmatprep.subr.mxu0 0.0
    %2152 = vmatpush1.msra.mxu0 0.0
    %2153 = vmatprep.subr.mxu0 0.0
    %2154 = vmatpush1.msra.mxu0 0.0
    %2155 = vmatprep.subr.mxu0 0.0
    %2156 = vmatpush1.msra.mxu0 0.0
    %2157 = vmatprep.subr.mxu0 0.0
    %2158 = vmatpush1.msra.mxu0 0.0
    %2159 = vmatprep.subr.mxu0 0.0
    %2160 = vmatpush1.msra.mxu0 0.0
    %2161 = vmatprep.subr.mxu0 0.0
    %v2162 = vand.u32 %v1678, 4294901760
    %2163 = vmatpush1.msra.mxu0 %v2162
    %2164 = vmatprep.subr.mxu0 0.0
    %v2165 = vand.u32 %v1677, 4294901760
    %2166 = vmatpush1.msra.mxu0 %v2165
    %2167 = vmatprep.subr.mxu0 0.0
    %v2168 = vand.u32 %v1676, 4294901760
    %2169 = vmatpush1.msra.mxu0 %v2168
    %2170 = vmatprep.subr.mxu0 0.0
    %v2171 = vand.u32 %v1675, 4294901760
    %2172 = vmatpush1.msra.mxu0 %v2171
    %2173 = vmatprep.subr.mxu0 0.0
    %2174 = vmatpush2.msra.mxu0 0.0
    %2175 = vmatprep.subr.mxu0 0.0
    %2176 = vmatpush2.msra.mxu0 0.0
    %2177 = vmatprep.subr.mxu0 0.0
    %2178 = vmatpush2.msra.mxu0 0.0
    %2179 = vmatprep.subr.mxu0 0.0
    %2180 = vmatpush2.msra.mxu0 0.0
    %2181 = vmatprep.subr.mxu0 0.0
    %2182 = vmatpush2.msra.mxu0 0.0
    %2183 = vmatprep.subr.mxu0 0.0
    %2184 = vmatpush2.msra.mxu0 0.0
    %2185 = vmatprep.subr.mxu0 0.0
    %2186 = vmatpush2.msra.mxu0 0.0
    %2187 = vmatprep.subr.mxu0 0.0
    %2188 = vmatpush2.msra.mxu0 0.0
    %2189 = vmatprep.subr.mxu0 0.0
    %2190 = vmatpush2.msra.mxu0 0.0
    %2191 = vmatprep.subr.mxu0 0.0
    %2192 = vmatpush2.msra.mxu0 0.0
    %2193 = vmatprep.subr.mxu0 0.0
    %2194 = vmatpush2.msra.mxu0 0.0
    %2195 = vmatprep.subr.mxu0 0.0
    %2196 = vmatpush2.msra.mxu0 0.0
    %2197 = vmatprep.subr.mxu0 0.0
    %2198 = vmatpush2.msra.mxu0 0.0
    %2199 = vmatprep.subr.mxu0 0.0
    %2200 = vmatpush2.msra.mxu0 0.0
    %2201 = vmatprep.subr.mxu0 0.0
    %2202 = vmatpush2.msra.mxu0 0.0
    %2203 = vmatprep.subr.mxu0 0.0
    %2204 = vmatpush2.msra.mxu0 0.0
    %2205 = vmatprep.mubr.f32.mxu0 0.0
    %v2206 = vand.u32 %v1685, 4294901760
    %2207 = vmatmul.mubr.f32.gmra.mxu0 %v2206
    %v2208 = vpop.f32.mrf.mxu0
    %v2209 = vadd.f32 %v2128, %v2208
    %v2210 = vpop.f32.mrf.mxu0
    %2211 = vmatprep.mubr.f32.mxu0 0.0
    %v2212 = vand.u32 %v1688, 4294901760
    %2213 = vmatmul.mubr.f32.gmra.mxu0 %v2212
    %v2214 = vpop.f32.mrf.mxu0
    %v2215 = vadd.f32 %v2134, %v2214
    %v2216 = vpop.f32.mrf.mxu0
    %2217 = vdwg.mxu0
    %v2218 = vsel %vm82, %v2209, 0.0
    %2219 = vadd.xlane.f32.xlu0 %v2218
    %v2220 = vpop.xlane.xlu0 %2219
    %v2221 = vsel %vm82, %v2215, 0.0
    %2222 = vadd.xlane.f32.xlu0 %v2221
    %v2223 = vpop.xlane.xlu0 %2222
    %v2224 = vrcp.pop 32.0
    %v2225 = vmul.f32 %v2220, %v2224
    %v2226 = vmul.f32 %v2223, %v2224
    %v2227 = vsub.f32 %v2209, %v2225
    %v2228 = vsub.f32 %v2215, %v2226
    %v2229 = vmul.f32 %v2227, %v2227
    %v2230 = vmul.f32 %v2228, %v2228
    %v2231 = vsel %vm82, %v2229, 0.0
    %2232 = vadd.xlane.f32.xlu0 %v2231
    %v2233 = vpop.xlane.xlu0 %2232
    %v2234 = vsel %vm82, %v2230, 0.0
    %2235 = vadd.xlane.f32.xlu0 %v2234
    %v2236 = vpop.xlane.xlu0 %2235
    %v2237 = vmul.f32 %v2233, %v2224
    %v2238 = vmul.f32 %v2236, %v2224
    %v2239 = vadd.f32 %v2237, 1e-05
    %v2240 = vadd.f32 %v2238, 1e-05
    %v2241 = vrsqrt.pop %v2239
    %v2242 = vrsqrt.pop %v2240
    %v2243 = vmul.f32 %v2227, %v2241
    %v2244 = vmul.f32 %v2228, %v2242
    %v2245 = vld [vmem:[%s4 + $0x1] sm:$0x1]
    %v2246 = vlaneseq
    %v2247 = vshrl.u32 %v2246, 7
    %v2248 = vsub.s32 0, %v2247
    %v2249 = vrot.slane %v2245, %v2248
    %v2250 = vmul.f32 %v2243, %v2249
    %v2251 = vmul.f32 %v2244, %v2249
    %v2252 = vld [vmem:[%s4 + $0x2] sm:$0x1]
    %v2253 = vlaneseq
    %v2254 = vshrl.u32 %v2253, 7
    %v2255 = vsub.s32 0, %v2254
    %v2256 = vrot.slane %v2252, %v2255
    %v2257 = vadd.f32 %v2250, %v2256
    %v2258 = vadd.f32 %v2251, %v2256
    %v2259 = vsub.f32 0.0, %v2257
    %v2260 = vsub.f32 0.0, %v2258
    %v2261 = vmul.f32 %v2259, 1.442695
    %v2262 = vpow.pop %v2261
    %v2263 = vmul.f32 %v2260, 1.442695
    %v2264 = vpow.pop %v2263
    %v2265 = vadd.f32 %v2262, 1.0
    %v2266 = vadd.f32 %v2264, 1.0
    %v2267 = vrcp.pop %v2265
    %v2268 = vmul.f32 1.0, %v2267
    %v2269 = vrcp.pop %v2266
    %v2270 = vmul.f32 1.0, %v2269
    %v2271 = vmul.f32 %v2257, %v2268
    %v2272 = vmul.f32 %v2258, %v2270
    %2273 = vst.msk [vmem:[#allocation8] sm:$0xff] %vm82, %v2271
    %2274 = vst.msk [vmem:[#allocation8 + $0x8] sm:$0xff] %vm82, %v2272
    // Predicated region
    $region34: #{tpu_custom_call.1} parent=1 // pred_check
      _
    $region35: #{tpu_custom_call.1} parent=1 // pred_check_branch
      %2276 = sbr.rel (0) target = $region37
    $region36: #{tpu_custom_call.1} parent=1 // pred_region
      %s2278 = ssub.s32 256, 256
      %2279 = vsyncadd [#allocation4], %s2278
      %s2280 = sshll.u32 [#allocation8], 4
      %s2281 = int_to_ptr.vmem [resolvable:$true] %s2280
      %2286 = dma.vmem_to_hbm [thread:$0]  %s2281, 256, %s5, [#allocation4], 128, 128, 8
    $region37: #{tpu_custom_call.1} parent=1 // pred_fallthru
      _
    // Predicated region
    $region38: #{tpu_custom_call.1} parent=1 // pred_check
      _
    $region39: #{tpu_custom_call.1} parent=1 // pred_check_branch
      %2288 = sbr.rel (0) target = $region41
    $region40: #{tpu_custom_call.1} parent=1 // pred_region
      %2289 = dma.done [#allocation4], 256
    $region41: #{tpu_custom_call.1} parent=1 // pred_fallthru
      _
    %2290 = vsyncpa [#allocation3], 1
    %2291 = vsyncpa [#allocation6], 1
    %2292 = vsyncpa [#allocation4], 1

</llo_original>
